<compile_context>
chip_gen: v6e
topology: v6e:2x2x1
jax: 0.10.0
libtpu: 0.0.40
codegen_flags: <defaults>
</compile_context>

<pallas_src>
import jax
import jax.numpy as jnp
import numpy as np
from jax.experimental import pallas as pl
from jax.experimental.pallas import tpu as pltpu


def _aa_down_kernel(x_ref, bwt_ref, bht_ref, out_ref):
    tc, H, W = x_ref.shape
    _, Ho, Wo = out_ref.shape

    bwt = bwt_ref[...]                     # (W, Wo)  horizontal blur + downsample
    bht = bht_ref[...]                     # (H, Ho)  vertical   blur + downsample
    # Explicit precision: exact f32 path vs. single-pass bf16 path.
    prec = jax.lax.Precision.HIGHEST if bwt.dtype == jnp.float32 else None

    x2d = x_ref[...].reshape(tc * H, W)    # merge leading dims: free re-indexing
    if x2d.dtype != bwt.dtype:
        x2d = x2d.astype(bwt.dtype)

    # ---- Horizontal pass: one big MXU matmul over the whole block (M = tc*H). ----
    z = jnp.dot(x2d, bwt, preferred_element_type=jnp.float32,
                precision=prec)                               # (tc*H, Wo), f32 acc

    # ---- Vertical pass as one big matmul (M = tc*Wo): out[c] = (z[c]^T @ B_h^T)^T ----
    # Reshape / minor-transpose while still f32 so the sublane splits/merges stay on the
    # 8-row tile; the transposes are XLU work (idle unit in this kernel).
    z3 = z.reshape(tc, H, Wo)                                 # split leading dim
    zt = jnp.transpose(z3, (0, 2, 1)).reshape(tc * Wo, H)     # (tc*Wo, H)
    if zt.dtype != bht.dtype:
        zt = zt.astype(bht.dtype)          # single documented cast (bf16 path only)
    yt = jnp.dot(zt, bht, preferred_element_type=jnp.float32,
                 precision=prec)                              # (tc*Wo, Ho), f32 acc
    y = jnp.transpose(yt.reshape(tc, Wo, Ho), (0, 2, 1))      # (tc, Ho, Wo)

    out_ref[...] = y.astype(out_ref.dtype)


def _blur_matrix(out_size, in_size, stride):
    """B[o, i] = a_norm[i + 1 - o*stride] (a_norm = [1,2,1]/4), zero elsewhere.

    The '+1' folds the conv's zero padding (padding=1) into the matrix, so the kernel
    never needs a padded copy of x.  B_h @ X @ B_w^T == conv2d(X, (a⊗a)/16, stride,
    padding=1) exactly.
    """
    a = np.array([1.0, 2.0, 1.0], np.float64) / 4.0
    o = np.arange(out_size)[:, None]
    i = np.arange(in_size)[None, :]
    k = i + 1 - o * stride
    m = (k >= 0) & (k <= 2)
    return np.where(m, a[np.clip(k, 0, 2)], 0.0).astype(np.float32)


def _vmem_budget():
    """Chip-aware (block budget, vmem_limit_bytes)."""
    try:
        cap = int(pltpu.get_tpu_info().vmem_capacity_bytes)
    except Exception:
        cap = 64 * 1024 * 1024   # conservative fallback (v7x-sized VMEM)
    return (cap * 3) // 8, (cap * 3) // 4


def _pick_block_channels(nc, H, W, Ho, Wo, itemsize, budget_bytes):
    """Largest divisor of N*C whose working set fits the VMEM budget, preferring
    at least 2 grid steps (pipelining overlap + v7x megacore sharding)."""
    def est(tc):
        io = 2 * tc * (H * W + Ho * Wo) * itemsize                 # double-buffered blocks
        f32 = 4 * tc * (2 * H * Wo + Wo * Ho + 2 * Ho * Wo)        # z/zt, yt, y + transpose copy
        return (io + f32) * 3 // 2                                  # headroom for compiler temps

    divisors = [d for d in range(1, nc + 1) if nc % d == 0]
    fitting = [d for d in divisors if est(d) <= budget_bytes] or [1]
    multi = [d for d in fitting if nc // d >= 2]
    return max(multi) if multi else max(fitting)


def anti_alias_downsample(x, stride):
    """Matches AntiAliasDownsample.forward: F.conv2d(x, filt, stride, padding=1, groups=C)."""
    N, C, H, W = x.shape
    Ho = (H - 1) // stride + 1
    Wo = (W - 1) // stride + 1
    NC = N * C

    # bf16 weights for bf16 inputs (0.25/0.5 are exact); f32 otherwise; always f32 accumulate.
    wdtype = jnp.bfloat16 if x.dtype == jnp.bfloat16 else jnp.float32
    bwt = jnp.asarray(_blur_matrix(Wo, W, stride).T, dtype=wdtype)   # (W, Wo)
    bht = jnp.asarray(_blur_matrix(Ho, H, stride).T, dtype=wdtype)   # (H, Ho)

    budget, vmem_limit = _vmem_budget()
    tc = _pick_block_channels(NC, H, W, Ho, Wo, x.dtype.itemsize, budget)

    x3 = x.reshape(NC, H, W)   # collapse leading dims: metadata-only, no HBM copy
    grid = (NC // tc,)

    flops = 2 * NC * (H * W * Wo + Wo * H * Ho)
    bytes_accessed = (NC * (H * W + Ho * Wo) * x.dtype.itemsize
                      + (W * Wo + H * Ho) * bwt.dtype.itemsize)

    out3 = pl.pallas_call(
        _aa_down_kernel,
        out_shape=jax.ShapeDtypeStruct((NC, Ho, Wo), x.dtype),
        grid=grid,
        in_specs=[
            pl.BlockSpec((tc, H, W), lambda i: (i, 0, 0)),
            pl.BlockSpec((W, Wo), lambda i: (0, 0)),
            pl.BlockSpec((H, Ho), lambda i: (0, 0)),
        ],
        out_specs=pl.BlockSpec((tc, Ho, Wo), lambda i: (i, 0, 0)),
        compiler_params=pltpu.CompilerParams(
            dimension_semantics=("parallel",),
            vmem_limit_bytes=vmem_limit,
        ),
        cost_estimate=pl.CostEstimate(flops=flops, transcendentals=0,
                                      bytes_accessed=bytes_accessed),
    )(x3, bwt, bht)
    return out3.reshape(N, C, Ho, Wo)


def _reference_conv(x, stride):
    """Pure-JAX reference: grouped 3x3 conv with the fixed anti-alias filter."""
    N, C, H, W = x.shape
    a = jnp.array([1.0, 2.0, 1.0], jnp.float32)
    filt = a[:, None] * a[None, :]
    filt = filt / jnp.sum(filt)
    w = jnp.tile(filt[None, None, :, :], (C, 1, 1, 1))  # (C, 1, 3, 3)
    return jax.lax.conv_general_dilated(
        x, w, window_strides=(stride, stride), padding=((1, 1), (1, 1)),
        dimension_numbers=("NCHW", "OIHW", "NCHW"), feature_group_count=C,
        precision=jax.lax.Precision.HIGHEST)


if __name__ == "__main__":
    key = jax.random.PRNGKey(0)
    N, C, H, W = 2, 4, 16, 16
    x = jax.random.normal(key, (N, C, H, W), dtype=jnp.float32)

    for stride in (2, 1):
        out = jax.block_until_ready(anti_alias_downsample(x, stride))
        ref = jax.block_until_ready(_reference_conv(x, stride))
        assert out.shape == ref.shape, (stride, out.shape, ref.shape)
        err = float(np.max(np.abs(np.asarray(out) - np.asarray(ref))))
        # 1e-3 tolerance covers a worst-case single-pass bf16 lowering of an f32 matmul;
        # with precision=HIGHEST respected on both sides the agreement is ~1e-6.
        assert np.allclose(np.asarray(out), np.asarray(ref), atol=1e-3, rtol=1e-3), (stride, err)

    print("KERNEL_OK")
</pallas_src>

<mosaic_0001>
module attributes {stable_mosaic.version = 11 : i64} {
  func.func @_aa_down_kernel(%arg0: i32, %arg1: memref<4x16x16xf32, #tpu.memory_space<vmem>>, %arg2: memref<16x8xf32, #tpu.memory_space<vmem>>, %arg3: memref<16x8xf32, #tpu.memory_space<vmem>>, %arg4: memref<4x8x8xf32, #tpu.memory_space<vmem>>) attributes {dimension_semantics = [#tpu.dimension_semantics<parallel>], iteration_bounds = array<i64: 2>, scalar_prefetch = 0 : i64, scratch_operands = 0 : i64, tpu.core_type = #tpu.core_type<tc>, window_params = [{transform_indices = @transform_0, window_bounds = array<i64: 4, 16, 16>}, {pipeline_mode = #tpu.pipeline_mode<synchronous>, transform_indices = @transform_1, window_bounds = array<i64: 16, 8>}, {pipeline_mode = #tpu.pipeline_mode<synchronous>, transform_indices = @transform_2, window_bounds = array<i64: 16, 8>}, {transform_indices = @transform_3, window_bounds = array<i64: 4, 8, 8>}]} {
    %c0 = arith.constant 0 : index
    %c0_0 = arith.constant 0 : index
    %0 = vector.load %arg2[%c0, %c0_0] : memref<16x8xf32, #tpu.memory_space<vmem>>, vector<16x8xf32>
    %c0_1 = arith.constant 0 : index
    %c0_2 = arith.constant 0 : index
    %1 = vector.load %arg3[%c0_1, %c0_2] : memref<16x8xf32, #tpu.memory_space<vmem>>, vector<16x8xf32>
    %c0_3 = arith.constant 0 : index
    %c0_4 = arith.constant 0 : index
    %c0_5 = arith.constant 0 : index
    %2 = vector.load %arg1[%c0_3, %c0_4, %c0_5] : memref<4x16x16xf32, #tpu.memory_space<vmem>>, vector<4x16x16xf32>
    %3 = vector.shape_cast %2 : vector<4x16x16xf32> to vector<64x16xf32>
    %cst = arith.constant dense<0.000000e+00> : vector<64x8xf32>
    %4 = tpu.matmul %3, %0, %cst {dimension_numbers = #tpu.dot_dimension_numbers<[1], [0], [0], [1], [0, 0, 1, 1], [], []>, precision = #tpu.contract_precision<fp32>} : vector<64x16xf32>, vector<16x8xf32>, vector<64x8xf32> -> vector<64x8xf32>
    %5 = vector.shape_cast %4 : vector<64x8xf32> to vector<4x16x8xf32>
    %6 = tpu.transpose %5, [0, 2, 1] : vector<4x16x8xf32> -> vector<4x8x16xf32>
    %7 = vector.shape_cast %6 : vector<4x8x16xf32> to vector<32x16xf32>
    %cst_6 = arith.constant dense<0.000000e+00> : vector<32x8xf32>
    %8 = tpu.matmul %7, %1, %cst_6 {dimension_numbers = #tpu.dot_dimension_numbers<[1], [0], [0], [1], [0, 0, 1, 1], [], []>, precision = #tpu.contract_precision<fp32>} : vector<32x16xf32>, vector<16x8xf32>, vector<32x8xf32> -> vector<32x8xf32>
    %9 = vector.shape_cast %8 : vector<32x8xf32> to vector<4x8x8xf32>
    %10 = tpu.transpose %9, [0, 2, 1] : vector<4x8x8xf32> -> vector<4x8x8xf32>
    %c0_7 = arith.constant 0 : index
    %c0_8 = arith.constant 0 : index
    %c0_9 = arith.constant 0 : index
    %11 = vector.load %arg4[%c0_7, %c0_8, %c0_9] : memref<4x8x8xf32, #tpu.memory_space<vmem>>, vector<4x8x8xf32>
    tpu.vector_store %arg4[%c0_7, %c0_8, %c0_9], %10 {strides = array<i32>} : memref<4x8x8xf32, #tpu.memory_space<vmem>>, vector<4x8x8xf32>,
    return
  }
  func.func @transform_0(%arg0: i32) -> (i32, i32, i32) {
    %c0_i32 = arith.constant 0 : i32
    %c0_i32_0 = arith.constant 0 : i32
    %c0_i32_1 = arith.constant 0 : i32
    return %arg0, %c0_i32, %c0_i32_0 : i32, i32, i32
  }
  func.func @transform_1(%arg0: i32) -> (i32, i32) {
    %c0_i32 = arith.constant 0 : i32
    %c0_i32_0 = arith.constant 0 : i32
    %c0_i32_1 = arith.constant 0 : i32
    return %c0_i32, %c0_i32_0 : i32, i32
  }
  func.func @transform_2(%arg0: i32) -> (i32, i32) {
    %c0_i32 = arith.constant 0 : i32
    %c0_i32_0 = arith.constant 0 : i32
    %c0_i32_1 = arith.constant 0 : i32
    return %c0_i32, %c0_i32_0 : i32, i32
  }
  func.func @transform_3(%arg0: i32) -> (i32, i32, i32) {
    %c0_i32 = arith.constant 0 : i32
    %c0_i32_0 = arith.constant 0 : i32
    %c0_i32_1 = arith.constant 0 : i32
    return %arg0, %c0_i32, %c0_i32_0 : i32, i32, i32
  }
}

</mosaic_0001>

<llo_original>
// kernel: tpu_custom_call.1
$region0: #{tpu_custom_call.1}
  #allocation0 [shape = 'u32[]', space=smem, size = 0x4, offset = 0x4, fixed_abs, tag = 'smem constant byte address 0x4 - core index']
  #allocation1 [shape = 'u32[144,128]{1,0:T(1,128)}', space=vmem, size = 0x12000, scoped, tag = 'internal scratch']
  %s0 = inlined_call_operand.hbm [shape: f32[8,16,16], index: 0, kind: input, shape index: {}]
  %s1 = inlined_call_operand.vmem [shape: f32[16,8], index: 1, kind: input, shape index: {}]
  %s2 = inlined_call_operand.vmem [shape: f32[16,8], index: 2, kind: input, shape index: {}]
  %s3 = inlined_call_operand.hbm [shape: f32[8,8,8], index: 3, kind: output, shape index: {}]
  %s4 = sld [smem:[#allocation0]]
  $region49: #{tpu_custom_call.1} parent=0
    _
  %s6 = ssub.s32 1, %s4
  %s7 = scalar_select 0, %s6, %s4
  $region1: #{tpu_custom_call.1} parent=0
    #allocation2 [shape = 'u8[65536]{0}', space=vmem, size = 0x10000, scoped, tag = 'input window, operand 0']
    #allocation3 [shape = 's32[2]{0}', space=sflag, size = 0x8, scoped, tag = 'scoped memory for tpu_custom_call.1']
    #allocation4 [shape = 's32[2]{0}', space=sflag, size = 0x8, scoped, tag = 'scoped memory for tpu_custom_call.1']
    #allocation5 [shape = 'u8[32768]{0}', space=vmem, size = 0x8000, scoped, tag = 'output window, operand 0']
    %8 = vsyncpa [#allocation3], 0
    %s9 = scalar_lea.sflag [#allocation3], 1
    %10 = vsyncpa %s9, 0
    %11 = vsyncpa [#allocation4], 0
    %s12 = scalar_lea.sflag [#allocation4], 1
    %13 = vsyncpa %s12, 0
    loop: start=0, step=1, limit=4
    $region2: #{tpu_custom_call.1} parent=1 // loop_pre_header
      _
    $region3: #{tpu_custom_call.1} parent=1 // loop_header
      %s15 = sphi 0, %s19
      %p16 = scmp.ge.s32.totalorder %s15, 4
      %s25 = sphi 0, %s27
      %s28 = sphi 0, %s25
      %s29 = sphi 0, %s28
      %s45 = sphi 0, %s29
      %s49 = sphi 0, %s49
      %s51 = sphi 0, %s49
      %s52 = sphi 0, %s51
      %s66 = sphi 0, %s52
      %s70 = sphi 0, %s70
      %s72 = sphi 0, %s70
      %s73 = sphi 0, %s72
      %s87 = sphi 0, %s73
      %s93 = sphi 0, %s95
      %s96 = sphi 0, %s93
      %s97 = sphi 0, %s96
      %s113 = sphi 0, %s97
    $region4: #{tpu_custom_call.1} parent=1 // loop_header_branch
      %18 = sbr.rel (%p16) target = $region8
    $region5: #{tpu_custom_call.1} parent=1 // loop_body
      %s20 = ssub.s32 %s15, 1
      %s21 = ssub.s32 %s15, 2
      %s22 = sadd.s32 %s15, 1
      %s23 = ssub.s32 %s15, %s22
      %p24 = scmp.eq.s32.totalorder %s23, 0
      %s26 = sadd.s32 %s25, 1
      %s27 = scalar_select %p24, %s25, %s26
      %p30 = pneg %p24
      %p31 = scmp.eq.s32.totalorder %s15, 1
      %p32 = por %p30, %p31
      %p33 = scmp.ne.s32.totalorder %s25, %s28
      %p34 = scmp.eq.s32.totalorder %s15, 0
      %p35 = por %p33, %p34
      %p36 = scmp.ne.s32.totalorder %s25, %s28
      %p37 = scmp.eq.s32.totalorder %s20, 1
      %p38 = por %p36, %p37
      %p39 = scmp.ne.s32.totalorder %s28, %s29
      %p40 = scmp.eq.s32.totalorder %s20, 0
      %p41 = por %p39, %p40
      %p42 = scmp.ne.s32.totalorder %s28, %s29
      %p43 = scmp.eq.s32.totalorder %s21, 1
      %p44 = por %p42, %p43
      %p46 = scmp.ne.s32.totalorder %s29, %s45
      %p47 = scmp.eq.s32.totalorder %s21, 0
      %p48 = por %p46, %p47
      %s50 = sadd.s32 %s49, 1
      %p53 = scmp.eq.s32.totalorder %s15, 1
      %p54 = scmp.ne.s32.totalorder %s49, %s51
      %p55 = scmp.eq.s32.totalorder %s15, 0
      %p56 = por %p54, %p55
      %p57 = scmp.ne.s32.totalorder %s49, %s51
      %p58 = scmp.eq.s32.totalorder %s20, 1
      %p59 = por %p57, %p58
      %p60 = scmp.ne.s32.totalorder %s51, %s52
      %p61 = scmp.eq.s32.totalorder %s20, 0
      %p62 = por %p60, %p61
      %p63 = scmp.ne.s32.totalorder %s51, %s52
      %p64 = scmp.eq.s32.totalorder %s21, 1
      %p65 = por %p63, %p64
      %p67 = scmp.ne.s32.totalorder %s52, %s66
      %p68 = scmp.eq.s32.totalorder %s21, 0
      %p69 = por %p67, %p68
      %s71 = sadd.s32 %s70, 1
      %p74 = scmp.eq.s32.totalorder %s15, 1
      %p75 = scmp.ne.s32.totalorder %s70, %s72
      %p76 = scmp.eq.s32.totalorder %s15, 0
      %p77 = por %p75, %p76
      %p78 = scmp.ne.s32.totalorder %s70, %s72
      %p79 = scmp.eq.s32.totalorder %s20, 1
      %p80 = por %p78, %p79
      %p81 = scmp.ne.s32.totalorder %s72, %s73
      %p82 = scmp.eq.s32.totalorder %s20, 0
      %p83 = por %p81, %p82
      %p84 = scmp.ne.s32.totalorder %s72, %s73
      %p85 = scmp.eq.s32.totalorder %s21, 1
      %p86 = por %p84, %p85
      %p88 = scmp.ne.s32.totalorder %s73, %s87
      %p89 = scmp.eq.s32.totalorder %s21, 0
      %p90 = por %p88, %p89
      %s91 = ssub.s32 %s15, %s22
      %p92 = scmp.eq.s32.totalorder %s91, 0
      %s94 = sadd.s32 %s93, 1
      %s95 = scalar_select %p92, %s93, %s94
      %p98 = pneg %p92
      %p99 = scmp.eq.s32.totalorder %s15, 1
      %p100 = por %p98, %p99
      %p101 = scmp.ne.s32.totalorder %s93, %s96
      %p102 = scmp.eq.s32.totalorder %s15, 0
      %p103 = por %p101, %p102
      %p104 = scmp.ne.s32.totalorder %s93, %s96
      %p105 = scmp.eq.s32.totalorder %s20, 1
      %p106 = por %p104, %p105
      %p107 = scmp.ne.s32.totalorder %s96, %s97
      %p108 = scmp.eq.s32.totalorder %s20, 0
      %p109 = por %p107, %p108
      %p110 = scmp.ne.s32.totalorder %s96, %s97
      %p111 = scmp.eq.s32.totalorder %s21, 1
      %p112 = por %p110, %p111
      %p114 = scmp.ne.s32.totalorder %s97, %s113
      %p115 = scmp.eq.s32.totalorder %s21, 0
      %p116 = por %p114, %p115
      %p117 = scmp.le.s32.totalorder 1, %s15
      %p118 = scmp.lt.s32.totalorder %s15, 3
      %p119 = pnand %p117, %p118
      %p120 = pneg %p119
      // Predicated region
      $region9: #{tpu_custom_call.1} parent=5 // pred_check
        _
      $region10: #{tpu_custom_call.1} parent=5 // pred_check_branch
        %122 = sbr.rel (%p119) target = $region12
      $region11: #{tpu_custom_call.1} parent=5 // pred_region
        %s123 = ssub.s32 %s15, 1
        // Predicated region
        $region13: #{tpu_custom_call.1} parent=11 // pred_check
          %p124 = pneg %p62
        $region14: #{tpu_custom_call.1} parent=11 // pred_check_branch
          %126 = sbr.rel (%p124) target = $region16
        $region15: #{tpu_custom_call.1} parent=11 // pred_region
          _
        $region16: #{tpu_custom_call.1} parent=11 // pred_fallthru
          _
        // Predicated region
        $region17: #{tpu_custom_call.1} parent=11 // pred_check
          %p127 = pneg %p83
        $region18: #{tpu_custom_call.1} parent=11 // pred_check_branch
          %129 = sbr.rel (%p127) target = $region20
        $region19: #{tpu_custom_call.1} parent=11 // pred_region
          _
        $region20: #{tpu_custom_call.1} parent=11 // pred_fallthru
          _
      $region12: #{tpu_custom_call.1} parent=5 // pred_fallthru
        _
      %p130 = scmp.lt.s32.totalorder %s15, 2
      // Predicated region
      $region21: #{tpu_custom_call.1} parent=5 // pred_check
        %p131 = pneg %p130
      $region22: #{tpu_custom_call.1} parent=5 // pred_check_branch
        %133 = sbr.rel (%p131) target = $region24
      $region23: #{tpu_custom_call.1} parent=5 // pred_region
        // Predicated region
        $region25: #{tpu_custom_call.1} parent=23 // pred_check
          %p134 = pneg %p35
        $region26: #{tpu_custom_call.1} parent=23 // pred_check_branch
          %136 = sbr.rel (%p134) target = $region28
        $region27: #{tpu_custom_call.1} parent=23 // pred_region
          %s137 = sand.u32 %s25, 1
          %s138 = scalar_lea.sflag [#allocation3], %s137
          %s139 = sand.u32 %s25, 1
          %s140 = smul.addr %s139, 64
          %s141 = scalar_lea.vmem [#allocation2], %s140
          %s142 = smul.u32 4, %s15
          %s144 = ssub.s32 1024, 1024
          %145 = vsyncadd %s138, %s144
          %s146 = smul.addr %s142, 2
          %s147 = smul.addr %s146, 128
          %s148 = scalar_lea.hbm %s0, %s147
          %s149 = sshll.u32 %s141, 4
          %s150 = int_to_ptr.vmem [resolvable:$true] %s149
          %155 = dma.hbm_to_vmem [thread:$0]  %s148, 1024, %s150, %s138, 128, 128, 8
        $region28: #{tpu_custom_call.1} parent=23 // pred_fallthru
          _
      $region24: #{tpu_custom_call.1} parent=5 // pred_fallthru
        _
      %p156 = scmp.le.s32.totalorder 1, %s15
      %p157 = scmp.lt.s32.totalorder %s15, 3
      %p158 = pnand %p156, %p157
      %p159 = pneg %p158
      // Predicated region
      $region29: #{tpu_custom_call.1} parent=5 // pred_check
        _
      $region30: #{tpu_custom_call.1} parent=5 // pred_check_branch
        %161 = sbr.rel (%p158) target = $region32
      $region31: #{tpu_custom_call.1} parent=5 // pred_region
        %s162 = ssub.s32 %s15, 1
        %s163 = sand.u32 %s28, 1
        %s164 = scalar_lea.sflag [#allocation3], %s163
        %s165 = sand.u32 %s28, 1
        %s166 = smul.addr %s165, 64
        %s167 = scalar_lea.vmem [#allocation2], %s166
        // Predicated region
        $region33: #{tpu_custom_call.1} parent=31 // pred_check
          %p168 = pneg %p41
        $region34: #{tpu_custom_call.1} parent=31 // pred_check_branch
          %170 = sbr.rel (%p168) target = $region36
        $region35: #{tpu_custom_call.1} parent=31 // pred_region
          %171 = dma.done %s164, 1024
        $region36: #{tpu_custom_call.1} parent=31 // pred_fallthru
          _
        %s172 = sand.u32 %s28, 1
        %s173 = scalar_lea.sflag [#allocation3], %s172
        %s174 = sand.u32 %s28, 1
        %s175 = smul.addr %s174, 64
        %s176 = scalar_lea.vmem [#allocation2], %s175
        %p177 = pneg %p41
        %p178 = pneg %p38
        %p179 = pneg %p62
        %p180 = pneg %p59
        %p181 = pneg %p83
        %p182 = pneg %p80
        %p183 = pneg %p109
        %p184 = pneg %p106
        %s185 = sand.u32 %s96, 1
        %s186 = scalar_lea.sflag [#allocation4], %s185
        %s187 = sand.u32 %s96, 1
        %s188 = smul.addr %s187, 32
        %s189 = scalar_lea.vmem [#allocation5], %s188
        %s190 = smul.u32 4, %s20
        %s191 = smul.u32 4, %s20
        %v192 = vld [vmem:[%s1] sm:$0xff]
        %v193 = vld [vmem:[%s1 + $0x8] sm:$0xff]
        %v194 = vld [vmem:[%s2] sm:$0xff]
        %v195 = vld [vmem:[%s2 + $0x8] sm:$0xff]
        %v196 = vld [vmem:[%s167] sm:$0xff]
        %v197 = vld [vmem:[%s167 + $0x8] sm:$0xff]
        %v198 = vld [vmem:[%s167 + $0x10] sm:$0xff]
        %v199 = vld [vmem:[%s167 + $0x18] sm:$0xff]
        %v200 = vld [vmem:[%s167 + $0x20] sm:$0xff]
        %v201 = vld [vmem:[%s167 + $0x28] sm:$0xff]
        %v202 = vld [vmem:[%s167 + $0x30] sm:$0xff]
        %v203 = vld [vmem:[%s167 + $0x38] sm:$0xff]
        %vm204 = vcmask 130048
        %v206 = vsel %vm204, %v196, 0
        %v209 = vsel %vm204, %v197, 0
        %v212 = vsel %vm204, %v198, 0
        %v215 = vsel %vm204, %v199, 0
        %v218 = vsel %vm204, %v200, 0
        %v221 = vsel %vm204, %v201, 0
        %v224 = vsel %vm204, %v202, 0
        %v227 = vsel %vm204, %v203, 0
        %229 = vmatprep.subr.mxu0 0.0
        %230 = vmatpush1.msra.mxu0 0.0
        %231 = vmatprep.subr.mxu0 0.0
        %232 = vmatpush1.msra.mxu0 0.0
        %233 = vmatprep.subr.mxu0 0.0
        %234 = vmatpush1.msra.mxu0 0.0
        %235 = vmatprep.subr.mxu0 0.0
        %236 = vmatpush1.msra.mxu0 0.0
        %237 = vmatprep.subr.mxu0 0.0
        %238 = vmatpush1.msra.mxu0 0.0
        %239 = vmatprep.subr.mxu0 0.0
        %240 = vmatpush1.msra.mxu0 0.0
        %241 = vmatprep.subr.mxu0 0.0
        %242 = vmatpush1.msra.mxu0 0.0
        %243 = vmatprep.subr.mxu0 0.0
        %244 = vmatpush1.msra.mxu0 0.0
        %245 = vmatprep.subr.mxu0 0.0
        %246 = vmatpush1.msra.mxu0 0.0
        %247 = vmatprep.subr.mxu0 0.0
        %248 = vmatpush1.msra.mxu0 0.0
        %249 = vmatprep.subr.mxu0 0.0
        %250 = vmatpush1.msra.mxu0 0.0
        %251 = vmatprep.subr.mxu0 0.0
        %252 = vmatpush1.msra.mxu0 0.0
        %253 = vmatprep.subr.mxu0 0.0
        %254 = vmatpush1.msra.mxu0 0.0
        %255 = vmatprep.subr.mxu0 0.0
        %256 = vmatpush1.msra.mxu0 0.0
        %257 = vmatprep.subr.mxu0 0.0
        %v258 = vand.u32 %v193, 4294901760
        %259 = vmatpush1.msra.mxu0 %v258
        %260 = vmatprep.subr.mxu0 0.0
        %v261 = vand.u32 %v192, 4294901760
        %262 = vmatpush1.msra.mxu0 %v261
        %263 = vmatprep.subr.mxu0 0.0
        %264 = vmatpush2.msra.mxu0 0.0
        %265 = vmatprep.subr.mxu0 0.0
        %266 = vmatpush2.msra.mxu0 0.0
        %267 = vmatprep.subr.mxu0 0.0
        %268 = vmatpush2.msra.mxu0 0.0
        %269 = vmatprep.subr.mxu0 0.0
        %270 = vmatpush2.msra.mxu0 0.0
        %271 = vmatprep.subr.mxu0 0.0
        %272 = vmatpush2.msra.mxu0 0.0
        %273 = vmatprep.subr.mxu0 0.0
        %274 = vmatpush2.msra.mxu0 0.0
        %275 = vmatprep.subr.mxu0 0.0
        %276 = vmatpush2.msra.mxu0 0.0
        %277 = vmatprep.subr.mxu0 0.0
        %278 = vmatpush2.msra.mxu0 0.0
        %279 = vmatprep.subr.mxu0 0.0
        %280 = vmatpush2.msra.mxu0 0.0
        %281 = vmatprep.subr.mxu0 0.0
        %282 = vmatpush2.msra.mxu0 0.0
        %283 = vmatprep.subr.mxu0 0.0
        %284 = vmatpush2.msra.mxu0 0.0
        %285 = vmatprep.subr.mxu0 0.0
        %286 = vmatpush2.msra.mxu0 0.0
        %287 = vmatprep.subr.mxu0 0.0
        %288 = vmatpush2.msra.mxu0 0.0
        %289 = vmatprep.subr.mxu0 0.0
        %290 = vmatpush2.msra.mxu0 0.0
        %291 = vmatprep.subr.mxu0 0.0
        %292 = vmatpush2.msra.mxu0 0.0
        %293 = vmatprep.subr.mxu0 0.0
        %294 = vmatpush2.msra.mxu0 0.0
        %295 = vmatprep.mubr.f32.mxu0 0.0
        %v296 = vand.u32 %v206, 4294901760
        %v297 = vsub.f32 %v206, %v296
        %v298 = vand.u32 %v297, 4294901760
        %v299 = vsub.f32 %v297, %v298
        %v300 = vand.u32 %v299, 4294901760
        %301 = vmatmul.mubr.f32.gmra.mxu0 %v300
        %v302 = vpop.f32.mrf.mxu0
        %v303 = vadd.f32 0.0, %v302
        %v304 = vpop.f32.mrf.mxu0
        %305 = vmatprep.mubr.f32.mxu0 0.0
        %v306 = vand.u32 %v209, 4294901760
        %v307 = vsub.f32 %v209, %v306
        %v308 = vand.u32 %v307, 4294901760
        %v309 = vsub.f32 %v307, %v308
        %v310 = vand.u32 %v309, 4294901760
        %311 = vmatmul.mubr.f32.gmra.mxu0 %v310
        %v312 = vpop.f32.mrf.mxu0
        %v313 = vadd.f32 0.0, %v312
        %v314 = vpop.f32.mrf.mxu0
        %315 = vmatprep.mubr.f32.mxu0 0.0
        %v316 = vand.u32 %v212, 4294901760
        %v317 = vsub.f32 %v212, %v316
        %v318 = vand.u32 %v317, 4294901760
        %v319 = vsub.f32 %v317, %v318
        %v320 = vand.u32 %v319, 4294901760
        %321 = vmatmul.mubr.f32.gmra.mxu0 %v320
        %v322 = vpop.f32.mrf.mxu0
        %v323 = vadd.f32 0.0, %v322
        %v324 = vpop.f32.mrf.mxu0
        %325 = vmatprep.mubr.f32.mxu0 0.0
        %v326 = vand.u32 %v215, 4294901760
        %v327 = vsub.f32 %v215, %v326
        %v328 = vand.u32 %v327, 4294901760
        %v329 = vsub.f32 %v327, %v328
        %v330 = vand.u32 %v329, 4294901760
        %331 = vmatmul.mubr.f32.gmra.mxu0 %v330
        %v332 = vpop.f32.mrf.mxu0
        %v333 = vadd.f32 0.0, %v332
        %v334 = vpop.f32.mrf.mxu0
        %335 = vmatprep.mubr.f32.mxu0 0.0
        %v336 = vand.u32 %v218, 4294901760
        %v337 = vsub.f32 %v218, %v336
        %v338 = vand.u32 %v337, 4294901760
        %v339 = vsub.f32 %v337, %v338
        %v340 = vand.u32 %v339, 4294901760
        %341 = vmatmul.mubr.f32.gmra.mxu0 %v340
        %v342 = vpop.f32.mrf.mxu0
        %v343 = vadd.f32 0.0, %v342
        %v344 = vpop.f32.mrf.mxu0
        %345 = vmatprep.mubr.f32.mxu0 0.0
        %v346 = vand.u32 %v221, 4294901760
        %v347 = vsub.f32 %v221, %v346
        %v348 = vand.u32 %v347, 4294901760
        %v349 = vsub.f32 %v347, %v348
        %v350 = vand.u32 %v349, 4294901760
        %351 = vmatmul.mubr.f32.gmra.mxu0 %v350
        %v352 = vpop.f32.mrf.mxu0
        %v353 = vadd.f32 0.0, %v352
        %v354 = vpop.f32.mrf.mxu0
        %355 = vmatprep.mubr.f32.mxu0 0.0
        %v356 = vand.u32 %v224, 4294901760
        %v357 = vsub.f32 %v224, %v356
        %v358 = vand.u32 %v357, 4294901760
        %v359 = vsub.f32 %v357, %v358
        %v360 = vand.u32 %v359, 4294901760
        %361 = vmatmul.mubr.f32.gmra.mxu0 %v360
        %v362 = vpop.f32.mrf.mxu0
        %v363 = vadd.f32 0.0, %v362
        %v364 = vpop.f32.mrf.mxu0
        %365 = vmatprep.mubr.f32.mxu0 0.0
        %v366 = vand.u32 %v227, 4294901760
        %v367 = vsub.f32 %v227, %v366
        %v368 = vand.u32 %v367, 4294901760
        %v369 = vsub.f32 %v367, %v368
        %v370 = vand.u32 %v369, 4294901760
        %371 = vmatmul.mubr.f32.gmra.mxu0 %v370
        %v372 = vpop.f32.mrf.mxu0
        %v373 = vadd.f32 0.0, %v372
        %v374 = vpop.f32.mrf.mxu0
        %375 = vdwg.mxu0
        %376 = vmatprep.subr.mxu0 0.0
        %377 = vmatpush1.msra.mxu0 0.0
        %378 = vmatprep.subr.mxu0 0.0
        %379 = vmatpush1.msra.mxu0 0.0
        %380 = vmatprep.subr.mxu0 0.0
        %381 = vmatpush1.msra.mxu0 0.0
        %382 = vmatprep.subr.mxu0 0.0
        %383 = vmatpush1.msra.mxu0 0.0
        %384 = vmatprep.subr.mxu0 0.0
        %385 = vmatpush1.msra.mxu0 0.0
        %386 = vmatprep.subr.mxu0 0.0
        %387 = vmatpush1.msra.mxu0 0.0
        %388 = vmatprep.subr.mxu0 0.0
        %389 = vmatpush1.msra.mxu0 0.0
        %390 = vmatprep.subr.mxu0 0.0
        %391 = vmatpush1.msra.mxu0 0.0
        %392 = vmatprep.subr.mxu0 0.0
        %393 = vmatpush1.msra.mxu0 0.0
        %394 = vmatprep.subr.mxu0 0.0
        %395 = vmatpush1.msra.mxu0 0.0
        %396 = vmatprep.subr.mxu0 0.0
        %397 = vmatpush1.msra.mxu0 0.0
        %398 = vmatprep.subr.mxu0 0.0
        %399 = vmatpush1.msra.mxu0 0.0
        %400 = vmatprep.subr.mxu0 0.0
        %401 = vmatpush1.msra.mxu0 0.0
        %402 = vmatprep.subr.mxu0 0.0
        %403 = vmatpush1.msra.mxu0 0.0
        %404 = vmatprep.subr.mxu0 0.0
        %v405 = vand.u32 %v193, 4294901760
        %v406 = vsub.f32 %v193, %v405
        %v407 = vand.u32 %v406, 4294901760
        %v408 = vsub.f32 %v406, %v407
        %v409 = vand.u32 %v408, 4294901760
        %410 = vmatpush1.msra.mxu0 %v409
        %411 = vmatprep.subr.mxu0 0.0
        %v412 = vand.u32 %v192, 4294901760
        %v413 = vsub.f32 %v192, %v412
        %v414 = vand.u32 %v413, 4294901760
        %v415 = vsub.f32 %v413, %v414
        %v416 = vand.u32 %v415, 4294901760
        %417 = vmatpush1.msra.mxu0 %v416
        %418 = vmatprep.subr.mxu0 0.0
        %419 = vmatpush2.msra.mxu0 0.0
        %420 = vmatprep.subr.mxu0 0.0
        %421 = vmatpush2.msra.mxu0 0.0
        %422 = vmatprep.subr.mxu0 0.0
        %423 = vmatpush2.msra.mxu0 0.0
        %424 = vmatprep.subr.mxu0 0.0
        %425 = vmatpush2.msra.mxu0 0.0
        %426 = vmatprep.subr.mxu0 0.0
        %427 = vmatpush2.msra.mxu0 0.0
        %428 = vmatprep.subr.mxu0 0.0
        %429 = vmatpush2.msra.mxu0 0.0
        %430 = vmatprep.subr.mxu0 0.0
        %431 = vmatpush2.msra.mxu0 0.0
        %432 = vmatprep.subr.mxu0 0.0
        %433 = vmatpush2.msra.mxu0 0.0
        %434 = vmatprep.subr.mxu0 0.0
        %435 = vmatpush2.msra.mxu0 0.0
        %436 = vmatprep.subr.mxu0 0.0
        %437 = vmatpush2.msra.mxu0 0.0
        %438 = vmatprep.subr.mxu0 0.0
        %439 = vmatpush2.msra.mxu0 0.0
        %440 = vmatprep.subr.mxu0 0.0
        %441 = vmatpush2.msra.mxu0 0.0
        %442 = vmatprep.subr.mxu0 0.0
        %443 = vmatpush2.msra.mxu0 0.0
        %444 = vmatprep.subr.mxu0 0.0
        %445 = vmatpush2.msra.mxu0 0.0
        %446 = vmatprep.subr.mxu0 0.0
        %447 = vmatpush2.msra.mxu0 0.0
        %448 = vmatprep.subr.mxu0 0.0
        %449 = vmatpush2.msra.mxu0 0.0
        %450 = vmatprep.mubr.f32.mxu0 0.0
        %v451 = vand.u32 %v206, 4294901760
        %452 = vmatmul.mubr.f32.gmra.mxu0 %v451
        %v453 = vpop.f32.mrf.mxu0
        %v454 = vadd.f32 %v303, %v453
        %v455 = vpop.f32.mrf.mxu0
        %456 = vmatprep.mubr.f32.mxu0 0.0
        %v457 = vand.u32 %v209, 4294901760
        %458 = vmatmul.mubr.f32.gmra.mxu0 %v457
        %v459 = vpop.f32.mrf.mxu0
        %v460 = vadd.f32 %v313, %v459
        %v461 = vpop.f32.mrf.mxu0
        %462 = vmatprep.mubr.f32.mxu0 0.0
        %v463 = vand.u32 %v212, 4294901760
        %464 = vmatmul.mubr.f32.gmra.mxu0 %v463
        %v465 = vpop.f32.mrf.mxu0
        %v466 = vadd.f32 %v323, %v465
        %v467 = vpop.f32.mrf.mxu0
        %468 = vmatprep.mubr.f32.mxu0 0.0
        %v469 = vand.u32 %v215, 4294901760
        %470 = vmatmul.mubr.f32.gmra.mxu0 %v469
        %v471 = vpop.f32.mrf.mxu0
        %v472 = vadd.f32 %v333, %v471
        %v473 = vpop.f32.mrf.mxu0
        %474 = vmatprep.mubr.f32.mxu0 0.0
        %v475 = vand.u32 %v218, 4294901760
        %476 = vmatmul.mubr.f32.gmra.mxu0 %v475
        %v477 = vpop.f32.mrf.mxu0
        %v478 = vadd.f32 %v343, %v477
        %v479 = vpop.f32.mrf.mxu0
        %480 = vmatprep.mubr.f32.mxu0 0.0
        %v481 = vand.u32 %v221, 4294901760
        %482 = vmatmul.mubr.f32.gmra.mxu0 %v481
        %v483 = vpop.f32.mrf.mxu0
        %v484 = vadd.f32 %v353, %v483
        %v485 = vpop.f32.mrf.mxu0
        %486 = vmatprep.mubr.f32.mxu0 0.0
        %v487 = vand.u32 %v224, 4294901760
        %488 = vmatmul.mubr.f32.gmra.mxu0 %v487
        %v489 = vpop.f32.mrf.mxu0
        %v490 = vadd.f32 %v363, %v489
        %v491 = vpop.f32.mrf.mxu0
        %492 = vmatprep.mubr.f32.mxu0 0.0
        %v493 = vand.u32 %v227, 4294901760
        %494 = vmatmul.mubr.f32.gmra.mxu0 %v493
        %v495 = vpop.f32.mrf.mxu0
        %v496 = vadd.f32 %v373, %v495
        %v497 = vpop.f32.mrf.mxu0
        %498 = vdwg.mxu0
        %499 = vmatprep.subr.mxu0 0.0
        %500 = vmatpush1.msra.mxu0 0.0
        %501 = vmatprep.subr.mxu0 0.0
        %502 = vmatpush1.msra.mxu0 0.0
        %503 = vmatprep.subr.mxu0 0.0
        %504 = vmatpush1.msra.mxu0 0.0
        %505 = vmatprep.subr.mxu0 0.0
        %506 = vmatpush1.msra.mxu0 0.0
        %507 = vmatprep.subr.mxu0 0.0
        %508 = vmatpush1.msra.mxu0 0.0
        %509 = vmatprep.subr.mxu0 0.0
        %510 = vmatpush1.msra.mxu0 0.0
        %511 = vmatprep.subr.mxu0 0.0
        %512 = vmatpush1.msra.mxu0 0.0
        %513 = vmatprep.subr.mxu0 0.0
        %514 = vmatpush1.msra.mxu0 0.0
        %515 = vmatprep.subr.mxu0 0.0
        %516 = vmatpush1.msra.mxu0 0.0
        %517 = vmatprep.subr.mxu0 0.0
        %518 = vmatpush1.msra.mxu0 0.0
        %519 = vmatprep.subr.mxu0 0.0
        %520 = vmatpush1.msra.mxu0 0.0
        %521 = vmatprep.subr.mxu0 0.0
        %522 = vmatpush1.msra.mxu0 0.0
        %523 = vmatprep.subr.mxu0 0.0
        %524 = vmatpush1.msra.mxu0 0.0
        %525 = vmatprep.subr.mxu0 0.0
        %526 = vmatpush1.msra.mxu0 0.0
        %527 = vmatprep.subr.mxu0 0.0
        %v528 = vand.u32 %v193, 4294901760
        %v529 = vsub.f32 %v193, %v528
        %530 = vmatpush1.msra.mxu0 %v529
        %531 = vmatprep.subr.mxu0 0.0
        %v532 = vand.u32 %v192, 4294901760
        %v533 = vsub.f32 %v192, %v532
        %534 = vmatpush1.msra.mxu0 %v533
        %535 = vmatprep.subr.mxu0 0.0
        %536 = vmatpush2.msra.mxu0 0.0
        %537 = vmatprep.subr.mxu0 0.0
        %538 = vmatpush2.msra.mxu0 0.0
        %539 = vmatprep.subr.mxu0 0.0
        %540 = vmatpush2.msra.mxu0 0.0
        %541 = vmatprep.subr.mxu0 0.0
        %542 = vmatpush2.msra.mxu0 0.0
        %543 = vmatprep.subr.mxu0 0.0
        %544 = vmatpush2.msra.mxu0 0.0
        %545 = vmatprep.subr.mxu0 0.0
        %546 = vmatpush2.msra.mxu0 0.0
        %547 = vmatprep.subr.mxu0 0.0
        %548 = vmatpush2.msra.mxu0 0.0
        %549 = vmatprep.subr.mxu0 0.0
        %550 = vmatpush2.msra.mxu0 0.0
        %551 = vmatprep.subr.mxu0 0.0
        %552 = vmatpush2.msra.mxu0 0.0
        %553 = vmatprep.subr.mxu0 0.0
        %554 = vmatpush2.msra.mxu0 0.0
        %555 = vmatprep.subr.mxu0 0.0
        %556 = vmatpush2.msra.mxu0 0.0
        %557 = vmatprep.subr.mxu0 0.0
        %558 = vmatpush2.msra.mxu0 0.0
        %559 = vmatprep.subr.mxu0 0.0
        %560 = vmatpush2.msra.mxu0 0.0
        %561 = vmatprep.subr.mxu0 0.0
        %562 = vmatpush2.msra.mxu0 0.0
        %563 = vmatprep.subr.mxu0 0.0
        %564 = vmatpush2.msra.mxu0 0.0
        %565 = vmatprep.subr.mxu0 0.0
        %566 = vmatpush2.msra.mxu0 0.0
        %567 = vmatprep.mubr.f32.mxu0 0.0
        %v568 = vand.u32 %v206, 4294901760
        %v569 = vsub.f32 %v206, %v568
        %570 = vmatmul.mubr.f32.gmra.mxu0 %v569
        %v571 = vpop.f32.mrf.mxu0
        %v572 = vadd.f32 %v454, %v571
        %v573 = vpop.f32.mrf.mxu0
        %574 = vmatprep.mubr.f32.mxu0 0.0
        %v575 = vand.u32 %v209, 4294901760
        %v576 = vsub.f32 %v209, %v575
        %577 = vmatmul.mubr.f32.gmra.mxu0 %v576
        %v578 = vpop.f32.mrf.mxu0
        %v579 = vadd.f32 %v460, %v578
        %v580 = vpop.f32.mrf.mxu0
        %581 = vmatprep.mubr.f32.mxu0 0.0
        %v582 = vand.u32 %v212, 4294901760
        %v583 = vsub.f32 %v212, %v582
        %584 = vmatmul.mubr.f32.gmra.mxu0 %v583
        %v585 = vpop.f32.mrf.mxu0
        %v586 = vadd.f32 %v466, %v585
        %v587 = vpop.f32.mrf.mxu0
        %588 = vmatprep.mubr.f32.mxu0 0.0
        %v589 = vand.u32 %v215, 4294901760
        %v590 = vsub.f32 %v215, %v589
        %591 = vmatmul.mubr.f32.gmra.mxu0 %v590
        %v592 = vpop.f32.mrf.mxu0
        %v593 = vadd.f32 %v472, %v592
        %v594 = vpop.f32.mrf.mxu0
        %595 = vmatprep.mubr.f32.mxu0 0.0
        %v596 = vand.u32 %v218, 4294901760
        %v597 = vsub.f32 %v218, %v596
        %598 = vmatmul.mubr.f32.gmra.mxu0 %v597
        %v599 = vpop.f32.mrf.mxu0
        %v600 = vadd.f32 %v478, %v599
        %v601 = vpop.f32.mrf.mxu0
        %602 = vmatprep.mubr.f32.mxu0 0.0
        %v603 = vand.u32 %v221, 4294901760
        %v604 = vsub.f32 %v221, %v603
        %605 = vmatmul.mubr.f32.gmra.mxu0 %v604
        %v606 = vpop.f32.mrf.mxu0
        %v607 = vadd.f32 %v484, %v606
        %v608 = vpop.f32.mrf.mxu0
        %609 = vmatprep.mubr.f32.mxu0 0.0
        %v610 = vand.u32 %v224, 4294901760
        %v611 = vsub.f32 %v224, %v610
        %612 = vmatmul.mubr.f32.gmra.mxu0 %v611
        %v613 = vpop.f32.mrf.mxu0
        %v614 = vadd.f32 %v490, %v613
        %v615 = vpop.f32.mrf.mxu0
        %616 = vmatprep.mubr.f32.mxu0 0.0
        %v617 = vand.u32 %v227, 4294901760
        %v618 = vsub.f32 %v227, %v617
        %619 = vmatmul.mubr.f32.gmra.mxu0 %v618
        %v620 = vpop.f32.mrf.mxu0
        %v621 = vadd.f32 %v496, %v620
        %v622 = vpop.f32.mrf.mxu0
        %623 = vdwg.mxu0
        %624 = vmatprep.subr.mxu0 0.0
        %625 = vmatpush1.msra.mxu0 0.0
        %626 = vmatprep.subr.mxu0 0.0
        %627 = vmatpush1.msra.mxu0 0.0
        %628 = vmatprep.subr.mxu0 0.0
        %629 = vmatpush1.msra.mxu0 0.0
        %630 = vmatprep.subr.mxu0 0.0
        %631 = vmatpush1.msra.mxu0 0.0
        %632 = vmatprep.subr.mxu0 0.0
        %633 = vmatpush1.msra.mxu0 0.0
        %634 = vmatprep.subr.mxu0 0.0
        %635 = vmatpush1.msra.mxu0 0.0
        %636 = vmatprep.subr.mxu0 0.0
        %637 = vmatpush1.msra.mxu0 0.0
        %638 = vmatprep.subr.mxu0 0.0
        %639 = vmatpush1.msra.mxu0 0.0
        %640 = vmatprep.subr.mxu0 0.0
        %641 = vmatpush1.msra.mxu0 0.0
        %642 = vmatprep.subr.mxu0 0.0
        %643 = vmatpush1.msra.mxu0 0.0
        %644 = vmatprep.subr.mxu0 0.0
        %645 = vmatpush1.msra.mxu0 0.0
        %646 = vmatprep.subr.mxu0 0.0
        %647 = vmatpush1.msra.mxu0 0.0
        %648 = vmatprep.subr.mxu0 0.0
        %649 = vmatpush1.msra.mxu0 0.0
        %650 = vmatprep.subr.mxu0 0.0
        %651 = vmatpush1.msra.mxu0 0.0
        %652 = vmatprep.subr.mxu0 0.0
        %v653 = vand.u32 %v193, 4294901760
        %654 = vmatpush1.msra.mxu0 %v653
        %655 = vmatprep.subr.mxu0 0.0
        %v656 = vand.u32 %v192, 4294901760
        %657 = vmatpush1.msra.mxu0 %v656
        %658 = vmatprep.subr.mxu0 0.0
        %659 = vmatpush2.msra.mxu0 0.0
        %660 = vmatprep.subr.mxu0 0.0
        %661 = vmatpush2.msra.mxu0 0.0
        %662 = vmatprep.subr.mxu0 0.0
        %663 = vmatpush2.msra.mxu0 0.0
        %664 = vmatprep.subr.mxu0 0.0
        %665 = vmatpush2.msra.mxu0 0.0
        %666 = vmatprep.subr.mxu0 0.0
        %667 = vmatpush2.msra.mxu0 0.0
        %668 = vmatprep.subr.mxu0 0.0
        %669 = vmatpush2.msra.mxu0 0.0
        %670 = vmatprep.subr.mxu0 0.0
        %671 = vmatpush2.msra.mxu0 0.0
        %672 = vmatprep.subr.mxu0 0.0
        %673 = vmatpush2.msra.mxu0 0.0
        %674 = vmatprep.subr.mxu0 0.0
        %675 = vmatpush2.msra.mxu0 0.0
        %676 = vmatprep.subr.mxu0 0.0
        %677 = vmatpush2.msra.mxu0 0.0
        %678 = vmatprep.subr.mxu0 0.0
        %679 = vmatpush2.msra.mxu0 0.0
        %680 = vmatprep.subr.mxu0 0.0
        %681 = vmatpush2.msra.mxu0 0.0
        %682 = vmatprep.subr.mxu0 0.0
        %683 = vmatpush2.msra.mxu0 0.0
        %684 = vmatprep.subr.mxu0 0.0
        %685 = vmatpush2.msra.mxu0 0.0
        %686 = vmatprep.subr.mxu0 0.0
        %687 = vmatpush2.msra.mxu0 0.0
        %688 = vmatprep.subr.mxu0 0.0
        %689 = vmatpush2.msra.mxu0 0.0
        %690 = vmatprep.mubr.f32.mxu0 0.0
        %v691 = vand.u32 %v206, 4294901760
        %v692 = vsub.f32 %v206, %v691
        %v693 = vand.u32 %v692, 4294901760
        %694 = vmatmul.mubr.f32.gmra.mxu0 %v693
        %v695 = vpop.f32.mrf.mxu0
        %v696 = vadd.f32 %v572, %v695
        %v697 = vpop.f32.mrf.mxu0
        %698 = vmatprep.mubr.f32.mxu0 0.0
        %v699 = vand.u32 %v209, 4294901760
        %v700 = vsub.f32 %v209, %v699
        %v701 = vand.u32 %v700, 4294901760
        %702 = vmatmul.mubr.f32.gmra.mxu0 %v701
        %v703 = vpop.f32.mrf.mxu0
        %v704 = vadd.f32 %v579, %v703
        %v705 = vpop.f32.mrf.mxu0
        %706 = vmatprep.mubr.f32.mxu0 0.0
        %v707 = vand.u32 %v212, 4294901760
        %v708 = vsub.f32 %v212, %v707
        %v709 = vand.u32 %v708, 4294901760
        %710 = vmatmul.mubr.f32.gmra.mxu0 %v709
        %v711 = vpop.f32.mrf.mxu0
        %v712 = vadd.f32 %v586, %v711
        %v713 = vpop.f32.mrf.mxu0
        %714 = vmatprep.mubr.f32.mxu0 0.0
        %v715 = vand.u32 %v215, 4294901760
        %v716 = vsub.f32 %v215, %v715
        %v717 = vand.u32 %v716, 4294901760
        %718 = vmatmul.mubr.f32.gmra.mxu0 %v717
        %v719 = vpop.f32.mrf.mxu0
        %v720 = vadd.f32 %v593, %v719
        %v721 = vpop.f32.mrf.mxu0
        %722 = vmatprep.mubr.f32.mxu0 0.0
        %v723 = vand.u32 %v218, 4294901760
        %v724 = vsub.f32 %v218, %v723
        %v725 = vand.u32 %v724, 4294901760
        %726 = vmatmul.mubr.f32.gmra.mxu0 %v725
        %v727 = vpop.f32.mrf.mxu0
        %v728 = vadd.f32 %v600, %v727
        %v729 = vpop.f32.mrf.mxu0
        %730 = vmatprep.mubr.f32.mxu0 0.0
        %v731 = vand.u32 %v221, 4294901760
        %v732 = vsub.f32 %v221, %v731
        %v733 = vand.u32 %v732, 4294901760
        %734 = vmatmul.mubr.f32.gmra.mxu0 %v733
        %v735 = vpop.f32.mrf.mxu0
        %v736 = vadd.f32 %v607, %v735
        %v737 = vpop.f32.mrf.mxu0
        %738 = vmatprep.mubr.f32.mxu0 0.0
        %v739 = vand.u32 %v224, 4294901760
        %v740 = vsub.f32 %v224, %v739
        %v741 = vand.u32 %v740, 4294901760
        %742 = vmatmul.mubr.f32.gmra.mxu0 %v741
        %v743 = vpop.f32.mrf.mxu0
        %v744 = vadd.f32 %v614, %v743
        %v745 = vpop.f32.mrf.mxu0
        %746 = vmatprep.mubr.f32.mxu0 0.0
        %v747 = vand.u32 %v227, 4294901760
        %v748 = vsub.f32 %v227, %v747
        %v749 = vand.u32 %v748, 4294901760
        %750 = vmatmul.mubr.f32.gmra.mxu0 %v749
        %v751 = vpop.f32.mrf.mxu0
        %v752 = vadd.f32 %v621, %v751
        %v753 = vpop.f32.mrf.mxu0
        %754 = vdwg.mxu0
        %755 = vmatprep.subr.mxu0 0.0
        %756 = vmatpush1.msra.mxu0 0.0
        %757 = vmatprep.subr.mxu0 0.0
        %758 = vmatpush1.msra.mxu0 0.0
        %759 = vmatprep.subr.mxu0 0.0
        %760 = vmatpush1.msra.mxu0 0.0
        %761 = vmatprep.subr.mxu0 0.0
        %762 = vmatpush1.msra.mxu0 0.0
        %763 = vmatprep.subr.mxu0 0.0
        %764 = vmatpush1.msra.mxu0 0.0
        %765 = vmatprep.subr.mxu0 0.0
        %766 = vmatpush1.msra.mxu0 0.0
        %767 = vmatprep.subr.mxu0 0.0
        %768 = vmatpush1.msra.mxu0 0.0
        %769 = vmatprep.subr.mxu0 0.0
        %770 = vmatpush1.msra.mxu0 0.0
        %771 = vmatprep.subr.mxu0 0.0
        %772 = vmatpush1.msra.mxu0 0.0
        %773 = vmatprep.subr.mxu0 0.0
        %774 = vmatpush1.msra.mxu0 0.0
        %775 = vmatprep.subr.mxu0 0.0
        %776 = vmatpush1.msra.mxu0 0.0
        %777 = vmatprep.subr.mxu0 0.0
        %778 = vmatpush1.msra.mxu0 0.0
        %779 = vmatprep.subr.mxu0 0.0
        %780 = vmatpush1.msra.mxu0 0.0
        %781 = vmatprep.subr.mxu0 0.0
        %782 = vmatpush1.msra.mxu0 0.0
        %783 = vmatprep.subr.mxu0 0.0
        %v784 = vand.u32 %v193, 4294901760
        %v785 = vsub.f32 %v193, %v784
        %v786 = vand.u32 %v785, 4294901760
        %787 = vmatpush1.msra.mxu0 %v786
        %788 = vmatprep.subr.mxu0 0.0
        %v789 = vand.u32 %v192, 4294901760
        %v790 = vsub.f32 %v192, %v789
        %v791 = vand.u32 %v790, 4294901760
        %792 = vmatpush1.msra.mxu0 %v791
        %793 = vmatprep.subr.mxu0 0.0
        %794 = vmatpush2.msra.mxu0 0.0
        %795 = vmatprep.subr.mxu0 0.0
        %796 = vmatpush2.msra.mxu0 0.0
        %797 = vmatprep.subr.mxu0 0.0
        %798 = vmatpush2.msra.mxu0 0.0
        %799 = vmatprep.subr.mxu0 0.0
        %800 = vmatpush2.msra.mxu0 0.0
        %801 = vmatprep.subr.mxu0 0.0
        %802 = vmatpush2.msra.mxu0 0.0
        %803 = vmatprep.subr.mxu0 0.0
        %804 = vmatpush2.msra.mxu0 0.0
        %805 = vmatprep.subr.mxu0 0.0
        %806 = vmatpush2.msra.mxu0 0.0
        %807 = vmatprep.subr.mxu0 0.0
        %808 = vmatpush2.msra.mxu0 0.0
        %809 = vmatprep.subr.mxu0 0.0
        %810 = vmatpush2.msra.mxu0 0.0
        %811 = vmatprep.subr.mxu0 0.0
        %812 = vmatpush2.msra.mxu0 0.0
        %813 = vmatprep.subr.mxu0 0.0
        %814 = vmatpush2.msra.mxu0 0.0
        %815 = vmatprep.subr.mxu0 0.0
        %816 = vmatpush2.msra.mxu0 0.0
        %817 = vmatprep.subr.mxu0 0.0
        %818 = vmatpush2.msra.mxu0 0.0
        %819 = vmatprep.subr.mxu0 0.0
        %820 = vmatpush2.msra.mxu0 0.0
        %821 = vmatprep.subr.mxu0 0.0
        %822 = vmatpush2.msra.mxu0 0.0
        %823 = vmatprep.subr.mxu0 0.0
        %824 = vmatpush2.msra.mxu0 0.0
        %825 = vmatprep.mubr.f32.mxu0 0.0
        %v826 = vand.u32 %v206, 4294901760
        %827 = vmatmul.mubr.f32.gmra.mxu0 %v826
        %v828 = vpop.f32.mrf.mxu0
        %v829 = vadd.f32 %v696, %v828
        %v830 = vpop.f32.mrf.mxu0
        %831 = vmatprep.mubr.f32.mxu0 0.0
        %v832 = vand.u32 %v209, 4294901760
        %833 = vmatmul.mubr.f32.gmra.mxu0 %v832
        %v834 = vpop.f32.mrf.mxu0
        %v835 = vadd.f32 %v704, %v834
        %v836 = vpop.f32.mrf.mxu0
        %837 = vmatprep.mubr.f32.mxu0 0.0
        %v838 = vand.u32 %v212, 4294901760
        %839 = vmatmul.mubr.f32.gmra.mxu0 %v838
        %v840 = vpop.f32.mrf.mxu0
        %v841 = vadd.f32 %v712, %v840
        %v842 = vpop.f32.mrf.mxu0
        %843 = vmatprep.mubr.f32.mxu0 0.0
        %v844 = vand.u32 %v215, 4294901760
        %845 = vmatmul.mubr.f32.gmra.mxu0 %v844
        %v846 = vpop.f32.mrf.mxu0
        %v847 = vadd.f32 %v720, %v846
        %v848 = vpop.f32.mrf.mxu0
        %849 = vmatprep.mubr.f32.mxu0 0.0
        %v850 = vand.u32 %v218, 4294901760
        %851 = vmatmul.mubr.f32.gmra.mxu0 %v850
        %v852 = vpop.f32.mrf.mxu0
        %v853 = vadd.f32 %v728, %v852
        %v854 = vpop.f32.mrf.mxu0
        %855 = vmatprep.mubr.f32.mxu0 0.0
        %v856 = vand.u32 %v221, 4294901760
        %857 = vmatmul.mubr.f32.gmra.mxu0 %v856
        %v858 = vpop.f32.mrf.mxu0
        %v859 = vadd.f32 %v736, %v858
        %v860 = vpop.f32.mrf.mxu0
        %861 = vmatprep.mubr.f32.mxu0 0.0
        %v862 = vand.u32 %v224, 4294901760
        %863 = vmatmul.mubr.f32.gmra.mxu0 %v862
        %v864 = vpop.f32.mrf.mxu0
        %v865 = vadd.f32 %v744, %v864
        %v866 = vpop.f32.mrf.mxu0
        %867 = vmatprep.mubr.f32.mxu0 0.0
        %v868 = vand.u32 %v227, 4294901760
        %869 = vmatmul.mubr.f32.gmra.mxu0 %v868
        %v870 = vpop.f32.mrf.mxu0
        %v871 = vadd.f32 %v752, %v870
        %v872 = vpop.f32.mrf.mxu0
        %873 = vdwg.mxu0
        %874 = vmatprep.subr.mxu0 0.0
        %875 = vmatpush1.msra.mxu0 0.0
        %876 = vmatprep.subr.mxu0 0.0
        %877 = vmatpush1.msra.mxu0 0.0
        %878 = vmatprep.subr.mxu0 0.0
        %879 = vmatpush1.msra.mxu0 0.0
        %880 = vmatprep.subr.mxu0 0.0
        %881 = vmatpush1.msra.mxu0 0.0
        %882 = vmatprep.subr.mxu0 0.0
        %883 = vmatpush1.msra.mxu0 0.0
        %884 = vmatprep.subr.mxu0 0.0
        %885 = vmatpush1.msra.mxu0 0.0
        %886 = vmatprep.subr.mxu0 0.0
        %887 = vmatpush1.msra.mxu0 0.0
        %888 = vmatprep.subr.mxu0 0.0
        %889 = vmatpush1.msra.mxu0 0.0
        %890 = vmatprep.subr.mxu0 0.0
        %891 = vmatpush1.msra.mxu0 0.0
        %892 = vmatprep.subr.mxu0 0.0
        %893 = vmatpush1.msra.mxu0 0.0
        %894 = vmatprep.subr.mxu0 0.0
        %895 = vmatpush1.msra.mxu0 0.0
        %896 = vmatprep.subr.mxu0 0.0
        %897 = vmatpush1.msra.mxu0 0.0
        %898 = vmatprep.subr.mxu0 0.0
        %899 = vmatpush1.msra.mxu0 0.0
        %900 = vmatprep.subr.mxu0 0.0
        %901 = vmatpush1.msra.mxu0 0.0
        %902 = vmatprep.subr.mxu0 0.0
        %v903 = vand.u32 %v193, 4294901760
        %904 = vmatpush1.msra.mxu0 %v903
        %905 = vmatprep.subr.mxu0 0.0
        %v906 = vand.u32 %v192, 4294901760
        %907 = vmatpush1.msra.mxu0 %v906
        %908 = vmatprep.subr.mxu0 0.0
        %909 = vmatpush2.msra.mxu0 0.0
        %910 = vmatprep.subr.mxu0 0.0
        %911 = vmatpush2.msra.mxu0 0.0
        %912 = vmatprep.subr.mxu0 0.0
        %913 = vmatpush2.msra.mxu0 0.0
        %914 = vmatprep.subr.mxu0 0.0
        %915 = vmatpush2.msra.mxu0 0.0
        %916 = vmatprep.subr.mxu0 0.0
        %917 = vmatpush2.msra.mxu0 0.0
        %918 = vmatprep.subr.mxu0 0.0
        %919 = vmatpush2.msra.mxu0 0.0
        %920 = vmatprep.subr.mxu0 0.0
        %921 = vmatpush2.msra.mxu0 0.0
        %922 = vmatprep.subr.mxu0 0.0
        %923 = vmatpush2.msra.mxu0 0.0
        %924 = vmatprep.subr.mxu0 0.0
        %925 = vmatpush2.msra.mxu0 0.0
        %926 = vmatprep.subr.mxu0 0.0
        %927 = vmatpush2.msra.mxu0 0.0
        %928 = vmatprep.subr.mxu0 0.0
        %929 = vmatpush2.msra.mxu0 0.0
        %930 = vmatprep.subr.mxu0 0.0
        %931 = vmatpush2.msra.mxu0 0.0
        %932 = vmatprep.subr.mxu0 0.0
        %933 = vmatpush2.msra.mxu0 0.0
        %934 = vmatprep.subr.mxu0 0.0
        %935 = vmatpush2.msra.mxu0 0.0
        %936 = vmatprep.subr.mxu0 0.0
        %937 = vmatpush2.msra.mxu0 0.0
        %938 = vmatprep.subr.mxu0 0.0
        %939 = vmatpush2.msra.mxu0 0.0
        %940 = vmatprep.mubr.f32.mxu0 0.0
        %v941 = vand.u32 %v206, 4294901760
        %942 = vmatmul.mubr.f32.gmra.mxu0 %v941
        %v943 = vpop.f32.mrf.mxu0
        %v944 = vadd.f32 %v829, %v943
        %v945 = vpop.f32.mrf.mxu0
        %946 = vmatprep.mubr.f32.mxu0 0.0
        %v947 = vand.u32 %v209, 4294901760
        %948 = vmatmul.mubr.f32.gmra.mxu0 %v947
        %v949 = vpop.f32.mrf.mxu0
        %v950 = vadd.f32 %v835, %v949
        %v951 = vpop.f32.mrf.mxu0
        %952 = vmatprep.mubr.f32.mxu0 0.0
        %v953 = vand.u32 %v212, 4294901760
        %954 = vmatmul.mubr.f32.gmra.mxu0 %v953
        %v955 = vpop.f32.mrf.mxu0
        %v956 = vadd.f32 %v841, %v955
        %v957 = vpop.f32.mrf.mxu0
        %958 = vmatprep.mubr.f32.mxu0 0.0
        %v959 = vand.u32 %v215, 4294901760
        %960 = vmatmul.mubr.f32.gmra.mxu0 %v959
        %v961 = vpop.f32.mrf.mxu0
        %v962 = vadd.f32 %v847, %v961
        %v963 = vpop.f32.mrf.mxu0
        %964 = vmatprep.mubr.f32.mxu0 0.0
        %v965 = vand.u32 %v218, 4294901760
        %966 = vmatmul.mubr.f32.gmra.mxu0 %v965
        %v967 = vpop.f32.mrf.mxu0
        %v968 = vadd.f32 %v853, %v967
        %v969 = vpop.f32.mrf.mxu0
        %970 = vmatprep.mubr.f32.mxu0 0.0
        %v971 = vand.u32 %v221, 4294901760
        %972 = vmatmul.mubr.f32.gmra.mxu0 %v971
        %v973 = vpop.f32.mrf.mxu0
        %v974 = vadd.f32 %v859, %v973
        %v975 = vpop.f32.mrf.mxu0
        %976 = vmatprep.mubr.f32.mxu0 0.0
        %v977 = vand.u32 %v224, 4294901760
        %978 = vmatmul.mubr.f32.gmra.mxu0 %v977
        %v979 = vpop.f32.mrf.mxu0
        %v980 = vadd.f32 %v865, %v979
        %v981 = vpop.f32.mrf.mxu0
        %982 = vmatprep.mubr.f32.mxu0 0.0
        %v983 = vand.u32 %v227, 4294901760
        %984 = vmatmul.mubr.f32.gmra.mxu0 %v983
        %v985 = vpop.f32.mrf.mxu0
        %v986 = vadd.f32 %v871, %v985
        %v987 = vpop.f32.mrf.mxu0
        %988 = vdwg.mxu0
        %989 = vxpose.xlu0.b32.start [1/16] %v944, 128
        %990 = vxpose.xlu0.b32.cont [2/16] %v950, 128
        %991 = vxpose.xlu0.b32.cont [3/16] 0.0, 128
        %992 = vxpose.xlu0.b32.cont [4/16] 0.0, 128
        %993 = vxpose.xlu0.b32.cont [5/16] 0.0, 128
        %994 = vxpose.xlu0.b32.cont [6/16] 0.0, 128
        %995 = vxpose.xlu0.b32.cont [7/16] 0.0, 128
        %996 = vxpose.xlu0.b32.cont [8/16] 0.0, 128
        %997 = vxpose.xlu0.b32.cont [9/16] 0.0, 128
        %998 = vxpose.xlu0.b32.cont [10/16] 0.0, 128
        %999 = vxpose.xlu0.b32.cont [11/16] 0.0, 128
        %1000 = vxpose.xlu0.b32.cont [12/16] 0.0, 128
        %1001 = vxpose.xlu0.b32.cont [13/16] 0.0, 128
        %1002 = vxpose.xlu0.b32.cont [14/16] 0.0, 128
        %1003 = vxpose.xlu0.b32.cont [15/16] 0.0, 128
        %1004 = vxpose.xlu0.b32.end [16/16] 0.0, 128
        %v1005 = vpop.trf.xlu0
        %v1006 = vpop.trf.xlu0
        %v1007 = vpop.trf.xlu0
        %v1008 = vpop.trf.xlu0
        %v1009 = vpop.trf.xlu0
        %v1010 = vpop.trf.xlu0
        %v1011 = vpop.trf.xlu0
        %v1012 = vpop.trf.xlu0
        %v1013 = vpop.trf.xlu0
        %v1014 = vpop.trf.xlu0
        %v1015 = vpop.trf.xlu0
        %v1016 = vpop.trf.xlu0
        %v1017 = vpop.trf.xlu0
        %v1018 = vpop.trf.xlu0
        %v1019 = vpop.trf.xlu0
        %v1020 = vpop.trf.xlu0
        %1021 = vxpose.xlu0.b32.start [1/16] %v956, 128
        %1022 = vxpose.xlu0.b32.cont [2/16] %v962, 128
        %1023 = vxpose.xlu0.b32.cont [3/16] 0.0, 128
        %1024 = vxpose.xlu0.b32.cont [4/16] 0.0, 128
        %1025 = vxpose.xlu0.b32.cont [5/16] 0.0, 128
        %1026 = vxpose.xlu0.b32.cont [6/16] 0.0, 128
        %1027 = vxpose.xlu0.b32.cont [7/16] 0.0, 128
        %1028 = vxpose.xlu0.b32.cont [8/16] 0.0, 128
        %1029 = vxpose.xlu0.b32.cont [9/16] 0.0, 128
        %1030 = vxpose.xlu0.b32.cont [10/16] 0.0, 128
        %1031 = vxpose.xlu0.b32.cont [11/16] 0.0, 128
        %1032 = vxpose.xlu0.b32.cont [12/16] 0.0, 128
        %1033 = vxpose.xlu0.b32.cont [13/16] 0.0, 128
        %1034 = vxpose.xlu0.b32.cont [14/16] 0.0, 128
        %1035 = vxpose.xlu0.b32.cont [15/16] 0.0, 128
        %1036 = vxpose.xlu0.b32.end [16/16] 0.0, 128
        %v1037 = vpop.trf.xlu0
        %v1038 = vpop.trf.xlu0
        %v1039 = vpop.trf.xlu0
        %v1040 = vpop.trf.xlu0
        %v1041 = vpop.trf.xlu0
        %v1042 = vpop.trf.xlu0
        %v1043 = vpop.trf.xlu0
        %v1044 = vpop.trf.xlu0
        %v1045 = vpop.trf.xlu0
        %v1046 = vpop.trf.xlu0
        %v1047 = vpop.trf.xlu0
        %v1048 = vpop.trf.xlu0
        %v1049 = vpop.trf.xlu0
        %v1050 = vpop.trf.xlu0
        %v1051 = vpop.trf.xlu0
        %v1052 = vpop.trf.xlu0
        %1053 = vxpose.xlu0.b32.start [1/16] %v968, 128
        %1054 = vxpose.xlu0.b32.cont [2/16] %v974, 128
        %1055 = vxpose.xlu0.b32.cont [3/16] 0.0, 128
        %1056 = vxpose.xlu0.b32.cont [4/16] 0.0, 128
        %1057 = vxpose.xlu0.b32.cont [5/16] 0.0, 128
        %1058 = vxpose.xlu0.b32.cont [6/16] 0.0, 128
        %1059 = vxpose.xlu0.b32.cont [7/16] 0.0, 128
        %1060 = vxpose.xlu0.b32.cont [8/16] 0.0, 128
        %1061 = vxpose.xlu0.b32.cont [9/16] 0.0, 128
        %1062 = vxpose.xlu0.b32.cont [10/16] 0.0, 128
        %1063 = vxpose.xlu0.b32.cont [11/16] 0.0, 128
        %1064 = vxpose.xlu0.b32.cont [12/16] 0.0, 128
        %1065 = vxpose.xlu0.b32.cont [13/16] 0.0, 128
        %1066 = vxpose.xlu0.b32.cont [14/16] 0.0, 128
        %1067 = vxpose.xlu0.b32.cont [15/16] 0.0, 128
        %1068 = vxpose.xlu0.b32.end [16/16] 0.0, 128
        %v1069 = vpop.trf.xlu0
        %v1070 = vpop.trf.xlu0
        %v1071 = vpop.trf.xlu0
        %v1072 = vpop.trf.xlu0
        %v1073 = vpop.trf.xlu0
        %v1074 = vpop.trf.xlu0
        %v1075 = vpop.trf.xlu0
        %v1076 = vpop.trf.xlu0
        %v1077 = vpop.trf.xlu0
        %v1078 = vpop.trf.xlu0
        %v1079 = vpop.trf.xlu0
        %v1080 = vpop.trf.xlu0
        %v1081 = vpop.trf.xlu0
        %v1082 = vpop.trf.xlu0
        %v1083 = vpop.trf.xlu0
        %v1084 = vpop.trf.xlu0
        %1085 = vxpose.xlu0.b32.start [1/16] %v980, 128
        %1086 = vxpose.xlu0.b32.cont [2/16] %v986, 128
        %1087 = vxpose.xlu0.b32.cont [3/16] 0.0, 128
        %1088 = vxpose.xlu0.b32.cont [4/16] 0.0, 128
        %1089 = vxpose.xlu0.b32.cont [5/16] 0.0, 128
        %1090 = vxpose.xlu0.b32.cont [6/16] 0.0, 128
        %1091 = vxpose.xlu0.b32.cont [7/16] 0.0, 128
        %1092 = vxpose.xlu0.b32.cont [8/16] 0.0, 128
        %1093 = vxpose.xlu0.b32.cont [9/16] 0.0, 128
        %1094 = vxpose.xlu0.b32.cont [10/16] 0.0, 128
        %1095 = vxpose.xlu0.b32.cont [11/16] 0.0, 128
        %1096 = vxpose.xlu0.b32.cont [12/16] 0.0, 128
        %1097 = vxpose.xlu0.b32.cont [13/16] 0.0, 128
        %1098 = vxpose.xlu0.b32.cont [14/16] 0.0, 128
        %1099 = vxpose.xlu0.b32.cont [15/16] 0.0, 128
        %1100 = vxpose.xlu0.b32.end [16/16] 0.0, 128
        %v1101 = vpop.trf.xlu0
        %v1102 = vpop.trf.xlu0
        %v1103 = vpop.trf.xlu0
        %v1104 = vpop.trf.xlu0
        %v1105 = vpop.trf.xlu0
        %v1106 = vpop.trf.xlu0
        %v1107 = vpop.trf.xlu0
        %v1108 = vpop.trf.xlu0
        %v1109 = vpop.trf.xlu0
        %v1110 = vpop.trf.xlu0
        %v1111 = vpop.trf.xlu0
        %v1112 = vpop.trf.xlu0
        %v1113 = vpop.trf.xlu0
        %v1114 = vpop.trf.xlu0
        %v1115 = vpop.trf.xlu0
        %v1116 = vpop.trf.xlu0
        %v1118 = vsel %vm204, %v1005, 0
        %v1121 = vsel %vm204, %v1037, 0
        %v1124 = vsel %vm204, %v1069, 0
        %v1127 = vsel %vm204, %v1101, 0
        %1129 = vmatprep.subr.mxu0 0.0
        %1130 = vmatpush1.msra.mxu0 0.0
        %1131 = vmatprep.subr.mxu0 0.0
        %1132 = vmatpush1.msra.mxu0 0.0
        %1133 = vmatprep.subr.mxu0 0.0
        %1134 = vmatpush1.msra.mxu0 0.0
        %1135 = vmatprep.subr.mxu0 0.0
        %1136 = vmatpush1.msra.mxu0 0.0
        %1137 = vmatprep.subr.mxu0 0.0
        %1138 = vmatpush1.msra.mxu0 0.0
        %1139 = vmatprep.subr.mxu0 0.0
        %1140 = vmatpush1.msra.mxu0 0.0
        %1141 = vmatprep.subr.mxu0 0.0
        %1142 = vmatpush1.msra.mxu0 0.0
        %1143 = vmatprep.subr.mxu0 0.0
        %1144 = vmatpush1.msra.mxu0 0.0
        %1145 = vmatprep.subr.mxu0 0.0
        %1146 = vmatpush1.msra.mxu0 0.0
        %1147 = vmatprep.subr.mxu0 0.0
        %1148 = vmatpush1.msra.mxu0 0.0
        %1149 = vmatprep.subr.mxu0 0.0
        %1150 = vmatpush1.msra.mxu0 0.0
        %1151 = vmatprep.subr.mxu0 0.0
        %1152 = vmatpush1.msra.mxu0 0.0
        %1153 = vmatprep.subr.mxu0 0.0
        %1154 = vmatpush1.msra.mxu0 0.0
        %1155 = vmatprep.subr.mxu0 0.0
        %1156 = vmatpush1.msra.mxu0 0.0
        %1157 = vmatprep.subr.mxu0 0.0
        %v1158 = vand.u32 %v195, 4294901760
        %1159 = vmatpush1.msra.mxu0 %v1158
        %1160 = vmatprep.subr.mxu0 0.0
        %v1161 = vand.u32 %v194, 4294901760
        %1162 = vmatpush1.msra.mxu0 %v1161
        %1163 = vmatprep.subr.mxu0 0.0
        %1164 = vmatpush2.msra.mxu0 0.0
        %1165 = vmatprep.subr.mxu0 0.0
        %1166 = vmatpush2.msra.mxu0 0.0
        %1167 = vmatprep.subr.mxu0 0.0
        %1168 = vmatpush2.msra.mxu0 0.0
        %1169 = vmatprep.subr.mxu0 0.0
        %1170 = vmatpush2.msra.mxu0 0.0
        %1171 = vmatprep.subr.mxu0 0.0
        %1172 = vmatpush2.msra.mxu0 0.0
        %1173 = vmatprep.subr.mxu0 0.0
        %1174 = vmatpush2.msra.mxu0 0.0
        %1175 = vmatprep.subr.mxu0 0.0
        %1176 = vmatpush2.msra.mxu0 0.0
        %1177 = vmatprep.subr.mxu0 0.0
        %1178 = vmatpush2.msra.mxu0 0.0
        %1179 = vmatprep.subr.mxu0 0.0
        %1180 = vmatpush2.msra.mxu0 0.0
        %1181 = vmatprep.subr.mxu0 0.0
        %1182 = vmatpush2.msra.mxu0 0.0
        %1183 = vmatprep.subr.mxu0 0.0
        %1184 = vmatpush2.msra.mxu0 0.0
        %1185 = vmatprep.subr.mxu0 0.0
        %1186 = vmatpush2.msra.mxu0 0.0
        %1187 = vmatprep.subr.mxu0 0.0
        %1188 = vmatpush2.msra.mxu0 0.0
        %1189 = vmatprep.subr.mxu0 0.0
        %1190 = vmatpush2.msra.mxu0 0.0
        %1191 = vmatprep.subr.mxu0 0.0
        %1192 = vmatpush2.msra.mxu0 0.0
        %1193 = vmatprep.subr.mxu0 0.0
        %1194 = vmatpush2.msra.mxu0 0.0
        %1195 = vmatprep.mubr.f32.mxu0 0.0
        %v1196 = vand.u32 %v1118, 4294901760
        %v1197 = vsub.f32 %v1118, %v1196
        %v1198 = vand.u32 %v1197, 4294901760
        %v1199 = vsub.f32 %v1197, %v1198
        %v1200 = vand.u32 %v1199, 4294901760
        %1201 = vmatmul.mubr.f32.gmra.mxu0 %v1200
        %v1202 = vpop.f32.mrf.mxu0
        %v1203 = vadd.f32 0.0, %v1202
        %v1204 = vpop.f32.mrf.mxu0
        %1205 = vmatprep.mubr.f32.mxu0 0.0
        %v1206 = vand.u32 %v1121, 4294901760
        %v1207 = vsub.f32 %v1121, %v1206
        %v1208 = vand.u32 %v1207, 4294901760
        %v1209 = vsub.f32 %v1207, %v1208
        %v1210 = vand.u32 %v1209, 4294901760
        %1211 = vmatmul.mubr.f32.gmra.mxu0 %v1210
        %v1212 = vpop.f32.mrf.mxu0
        %v1213 = vadd.f32 0.0, %v1212
        %v1214 = vpop.f32.mrf.mxu0
        %1215 = vmatprep.mubr.f32.mxu0 0.0
        %v1216 = vand.u32 %v1124, 4294901760
        %v1217 = vsub.f32 %v1124, %v1216
        %v1218 = vand.u32 %v1217, 4294901760
        %v1219 = vsub.f32 %v1217, %v1218
        %v1220 = vand.u32 %v1219, 4294901760
        %1221 = vmatmul.mubr.f32.gmra.mxu0 %v1220
        %v1222 = vpop.f32.mrf.mxu0
        %v1223 = vadd.f32 0.0, %v1222
        %v1224 = vpop.f32.mrf.mxu0
        %1225 = vmatprep.mubr.f32.mxu0 0.0
        %v1226 = vand.u32 %v1127, 4294901760
        %v1227 = vsub.f32 %v1127, %v1226
        %v1228 = vand.u32 %v1227, 4294901760
        %v1229 = vsub.f32 %v1227, %v1228
        %v1230 = vand.u32 %v1229, 4294901760
        %1231 = vmatmul.mubr.f32.gmra.mxu0 %v1230
        %v1232 = vpop.f32.mrf.mxu0
        %v1233 = vadd.f32 0.0, %v1232
        %v1234 = vpop.f32.mrf.mxu0
        %1235 = vdwg.mxu0
        %1236 = vmatprep.subr.mxu0 0.0
        %1237 = vmatpush1.msra.mxu0 0.0
        %1238 = vmatprep.subr.mxu0 0.0
        %1239 = vmatpush1.msra.mxu0 0.0
        %1240 = vmatprep.subr.mxu0 0.0
        %1241 = vmatpush1.msra.mxu0 0.0
        %1242 = vmatprep.subr.mxu0 0.0
        %1243 = vmatpush1.msra.mxu0 0.0
        %1244 = vmatprep.subr.mxu0 0.0
        %1245 = vmatpush1.msra.mxu0 0.0
        %1246 = vmatprep.subr.mxu0 0.0
        %1247 = vmatpush1.msra.mxu0 0.0
        %1248 = vmatprep.subr.mxu0 0.0
        %1249 = vmatpush1.msra.mxu0 0.0
        %1250 = vmatprep.subr.mxu0 0.0
        %1251 = vmatpush1.msra.mxu0 0.0
        %1252 = vmatprep.subr.mxu0 0.0
        %1253 = vmatpush1.msra.mxu0 0.0
        %1254 = vmatprep.subr.mxu0 0.0
        %1255 = vmatpush1.msra.mxu0 0.0
        %1256 = vmatprep.subr.mxu0 0.0
        %1257 = vmatpush1.msra.mxu0 0.0
        %1258 = vmatprep.subr.mxu0 0.0
        %1259 = vmatpush1.msra.mxu0 0.0
        %1260 = vmatprep.subr.mxu0 0.0
        %1261 = vmatpush1.msra.mxu0 0.0
        %1262 = vmatprep.subr.mxu0 0.0
        %1263 = vmatpush1.msra.mxu0 0.0
        %1264 = vmatprep.subr.mxu0 0.0
        %v1265 = vand.u32 %v195, 4294901760
        %v1266 = vsub.f32 %v195, %v1265
        %v1267 = vand.u32 %v1266, 4294901760
        %v1268 = vsub.f32 %v1266, %v1267
        %v1269 = vand.u32 %v1268, 4294901760
        %1270 = vmatpush1.msra.mxu0 %v1269
        %1271 = vmatprep.subr.mxu0 0.0
        %v1272 = vand.u32 %v194, 4294901760
        %v1273 = vsub.f32 %v194, %v1272
        %v1274 = vand.u32 %v1273, 4294901760
        %v1275 = vsub.f32 %v1273, %v1274
        %v1276 = vand.u32 %v1275, 4294901760
        %1277 = vmatpush1.msra.mxu0 %v1276
        %1278 = vmatprep.subr.mxu0 0.0
        %1279 = vmatpush2.msra.mxu0 0.0
        %1280 = vmatprep.subr.mxu0 0.0
        %1281 = vmatpush2.msra.mxu0 0.0
        %1282 = vmatprep.subr.mxu0 0.0
        %1283 = vmatpush2.msra.mxu0 0.0
        %1284 = vmatprep.subr.mxu0 0.0
        %1285 = vmatpush2.msra.mxu0 0.0
        %1286 = vmatprep.subr.mxu0 0.0
        %1287 = vmatpush2.msra.mxu0 0.0
        %1288 = vmatprep.subr.mxu0 0.0
        %1289 = vmatpush2.msra.mxu0 0.0
        %1290 = vmatprep.subr.mxu0 0.0
        %1291 = vmatpush2.msra.mxu0 0.0
        %1292 = vmatprep.subr.mxu0 0.0
        %1293 = vmatpush2.msra.mxu0 0.0
        %1294 = vmatprep.subr.mxu0 0.0
        %1295 = vmatpush2.msra.mxu0 0.0
        %1296 = vmatprep.subr.mxu0 0.0
        %1297 = vmatpush2.msra.mxu0 0.0
        %1298 = vmatprep.subr.mxu0 0.0
        %1299 = vmatpush2.msra.mxu0 0.0
        %1300 = vmatprep.subr.mxu0 0.0
        %1301 = vmatpush2.msra.mxu0 0.0
        %1302 = vmatprep.subr.mxu0 0.0
        %1303 = vmatpush2.msra.mxu0 0.0
        %1304 = vmatprep.subr.mxu0 0.0
        %1305 = vmatpush2.msra.mxu0 0.0
        %1306 = vmatprep.subr.mxu0 0.0
        %1307 = vmatpush2.msra.mxu0 0.0
        %1308 = vmatprep.subr.mxu0 0.0
        %1309 = vmatpush2.msra.mxu0 0.0
        %1310 = vmatprep.mubr.f32.mxu0 0.0
        %v1311 = vand.u32 %v1118, 4294901760
        %1312 = vmatmul.mubr.f32.gmra.mxu0 %v1311
        %v1313 = vpop.f32.mrf.mxu0
        %v1314 = vadd.f32 %v1203, %v1313
        %v1315 = vpop.f32.mrf.mxu0
        %1316 = vmatprep.mubr.f32.mxu0 0.0
        %v1317 = vand.u32 %v1121, 4294901760
        %1318 = vmatmul.mubr.f32.gmra.mxu0 %v1317
        %v1319 = vpop.f32.mrf.mxu0
        %v1320 = vadd.f32 %v1213, %v1319
        %v1321 = vpop.f32.mrf.mxu0
        %1322 = vmatprep.mubr.f32.mxu0 0.0
        %v1323 = vand.u32 %v1124, 4294901760
        %1324 = vmatmul.mubr.f32.gmra.mxu0 %v1323
        %v1325 = vpop.f32.mrf.mxu0
        %v1326 = vadd.f32 %v1223, %v1325
        %v1327 = vpop.f32.mrf.mxu0
        %1328 = vmatprep.mubr.f32.mxu0 0.0
        %v1329 = vand.u32 %v1127, 4294901760
        %1330 = vmatmul.mubr.f32.gmra.mxu0 %v1329
        %v1331 = vpop.f32.mrf.mxu0
        %v1332 = vadd.f32 %v1233, %v1331
        %v1333 = vpop.f32.mrf.mxu0
        %1334 = vdwg.mxu0
        %1335 = vmatprep.subr.mxu0 0.0
        %1336 = vmatpush1.msra.mxu0 0.0
        %1337 = vmatprep.subr.mxu0 0.0
        %1338 = vmatpush1.msra.mxu0 0.0
        %1339 = vmatprep.subr.mxu0 0.0
        %1340 = vmatpush1.msra.mxu0 0.0
        %1341 = vmatprep.subr.mxu0 0.0
        %1342 = vmatpush1.msra.mxu0 0.0
        %1343 = vmatprep.subr.mxu0 0.0
        %1344 = vmatpush1.msra.mxu0 0.0
        %1345 = vmatprep.subr.mxu0 0.0
        %1346 = vmatpush1.msra.mxu0 0.0
        %1347 = vmatprep.subr.mxu0 0.0
        %1348 = vmatpush1.msra.mxu0 0.0
        %1349 = vmatprep.subr.mxu0 0.0
        %1350 = vmatpush1.msra.mxu0 0.0
        %1351 = vmatprep.subr.mxu0 0.0
        %1352 = vmatpush1.msra.mxu0 0.0
        %1353 = vmatprep.subr.mxu0 0.0
        %1354 = vmatpush1.msra.mxu0 0.0
        %1355 = vmatprep.subr.mxu0 0.0
        %1356 = vmatpush1.msra.mxu0 0.0
        %1357 = vmatprep.subr.mxu0 0.0
        %1358 = vmatpush1.msra.mxu0 0.0
        %1359 = vmatprep.subr.mxu0 0.0
        %1360 = vmatpush1.msra.mxu0 0.0
        %1361 = vmatprep.subr.mxu0 0.0
        %1362 = vmatpush1.msra.mxu0 0.0
        %1363 = vmatprep.subr.mxu0 0.0
        %v1364 = vand.u32 %v195, 4294901760
        %v1365 = vsub.f32 %v195, %v1364
        %1366 = vmatpush1.msra.mxu0 %v1365
        %1367 = vmatprep.subr.mxu0 0.0
        %v1368 = vand.u32 %v194, 4294901760
        %v1369 = vsub.f32 %v194, %v1368
        %1370 = vmatpush1.msra.mxu0 %v1369
        %1371 = vmatprep.subr.mxu0 0.0
        %1372 = vmatpush2.msra.mxu0 0.0
        %1373 = vmatprep.subr.mxu0 0.0
        %1374 = vmatpush2.msra.mxu0 0.0
        %1375 = vmatprep.subr.mxu0 0.0
        %1376 = vmatpush2.msra.mxu0 0.0
        %1377 = vmatprep.subr.mxu0 0.0
        %1378 = vmatpush2.msra.mxu0 0.0
        %1379 = vmatprep.subr.mxu0 0.0
        %1380 = vmatpush2.msra.mxu0 0.0
        %1381 = vmatprep.subr.mxu0 0.0
        %1382 = vmatpush2.msra.mxu0 0.0
        %1383 = vmatprep.subr.mxu0 0.0
        %1384 = vmatpush2.msra.mxu0 0.0
        %1385 = vmatprep.subr.mxu0 0.0
        %1386 = vmatpush2.msra.mxu0 0.0
        %1387 = vmatprep.subr.mxu0 0.0
        %1388 = vmatpush2.msra.mxu0 0.0
        %1389 = vmatprep.subr.mxu0 0.0
        %1390 = vmatpush2.msra.mxu0 0.0
        %1391 = vmatprep.subr.mxu0 0.0
        %1392 = vmatpush2.msra.mxu0 0.0
        %1393 = vmatprep.subr.mxu0 0.0
        %1394 = vmatpush2.msra.mxu0 0.0
        %1395 = vmatprep.subr.mxu0 0.0
        %1396 = vmatpush2.msra.mxu0 0.0
        %1397 = vmatprep.subr.mxu0 0.0
        %1398 = vmatpush2.msra.mxu0 0.0
        %1399 = vmatprep.subr.mxu0 0.0
        %1400 = vmatpush2.msra.mxu0 0.0
        %1401 = vmatprep.subr.mxu0 0.0
        %1402 = vmatpush2.msra.mxu0 0.0
        %1403 = vmatprep.mubr.f32.mxu0 0.0
        %v1404 = vand.u32 %v1118, 4294901760
        %v1405 = vsub.f32 %v1118, %v1404
        %1406 = vmatmul.mubr.f32.gmra.mxu0 %v1405
        %v1407 = vpop.f32.mrf.mxu0
        %v1408 = vadd.f32 %v1314, %v1407
        %v1409 = vpop.f32.mrf.mxu0
        %1410 = vmatprep.mubr.f32.mxu0 0.0
        %v1411 = vand.u32 %v1121, 4294901760
        %v1412 = vsub.f32 %v1121, %v1411
        %1413 = vmatmul.mubr.f32.gmra.mxu0 %v1412
        %v1414 = vpop.f32.mrf.mxu0
        %v1415 = vadd.f32 %v1320, %v1414
        %v1416 = vpop.f32.mrf.mxu0
        %1417 = vmatprep.mubr.f32.mxu0 0.0
        %v1418 = vand.u32 %v1124, 4294901760
        %v1419 = vsub.f32 %v1124, %v1418
        %1420 = vmatmul.mubr.f32.gmra.mxu0 %v1419
        %v1421 = vpop.f32.mrf.mxu0
        %v1422 = vadd.f32 %v1326, %v1421
        %v1423 = vpop.f32.mrf.mxu0
        %1424 = vmatprep.mubr.f32.mxu0 0.0
        %v1425 = vand.u32 %v1127, 4294901760
        %v1426 = vsub.f32 %v1127, %v1425
        %1427 = vmatmul.mubr.f32.gmra.mxu0 %v1426
        %v1428 = vpop.f32.mrf.mxu0
        %v1429 = vadd.f32 %v1332, %v1428
        %v1430 = vpop.f32.mrf.mxu0
        %1431 = vdwg.mxu0
        %1432 = vmatprep.subr.mxu0 0.0
        %1433 = vmatpush1.msra.mxu0 0.0
        %1434 = vmatprep.subr.mxu0 0.0
        %1435 = vmatpush1.msra.mxu0 0.0
        %1436 = vmatprep.subr.mxu0 0.0
        %1437 = vmatpush1.msra.mxu0 0.0
        %1438 = vmatprep.subr.mxu0 0.0
        %1439 = vmatpush1.msra.mxu0 0.0
        %1440 = vmatprep.subr.mxu0 0.0
        %1441 = vmatpush1.msra.mxu0 0.0
        %1442 = vmatprep.subr.mxu0 0.0
        %1443 = vmatpush1.msra.mxu0 0.0
        %1444 = vmatprep.subr.mxu0 0.0
        %1445 = vmatpush1.msra.mxu0 0.0
        %1446 = vmatprep.subr.mxu0 0.0
        %1447 = vmatpush1.msra.mxu0 0.0
        %1448 = vmatprep.subr.mxu0 0.0
        %1449 = vmatpush1.msra.mxu0 0.0
        %1450 = vmatprep.subr.mxu0 0.0
        %1451 = vmatpush1.msra.mxu0 0.0
        %1452 = vmatprep.subr.mxu0 0.0
        %1453 = vmatpush1.msra.mxu0 0.0
        %1454 = vmatprep.subr.mxu0 0.0
        %1455 = vmatpush1.msra.mxu0 0.0
        %1456 = vmatprep.subr.mxu0 0.0
        %1457 = vmatpush1.msra.mxu0 0.0
        %1458 = vmatprep.subr.mxu0 0.0
        %1459 = vmatpush1.msra.mxu0 0.0
        %1460 = vmatprep.subr.mxu0 0.0
        %v1461 = vand.u32 %v195, 4294901760
        %1462 = vmatpush1.msra.mxu0 %v1461
        %1463 = vmatprep.subr.mxu0 0.0
        %v1464 = vand.u32 %v194, 4294901760
        %1465 = vmatpush1.msra.mxu0 %v1464
        %1466 = vmatprep.subr.mxu0 0.0
        %1467 = vmatpush2.msra.mxu0 0.0
        %1468 = vmatprep.subr.mxu0 0.0
        %1469 = vmatpush2.msra.mxu0 0.0
        %1470 = vmatprep.subr.mxu0 0.0
        %1471 = vmatpush2.msra.mxu0 0.0
        %1472 = vmatprep.subr.mxu0 0.0
        %1473 = vmatpush2.msra.mxu0 0.0
        %1474 = vmatprep.subr.mxu0 0.0
        %1475 = vmatpush2.msra.mxu0 0.0
        %1476 = vmatprep.subr.mxu0 0.0
        %1477 = vmatpush2.msra.mxu0 0.0
        %1478 = vmatprep.subr.mxu0 0.0
        %1479 = vmatpush2.msra.mxu0 0.0
        %1480 = vmatprep.subr.mxu0 0.0
        %1481 = vmatpush2.msra.mxu0 0.0
        %1482 = vmatprep.subr.mxu0 0.0
        %1483 = vmatpush2.msra.mxu0 0.0
        %1484 = vmatprep.subr.mxu0 0.0
        %1485 = vmatpush2.msra.mxu0 0.0
        %1486 = vmatprep.subr.mxu0 0.0
        %1487 = vmatpush2.msra.mxu0 0.0
        %1488 = vmatprep.subr.mxu0 0.0
        %1489 = vmatpush2.msra.mxu0 0.0
        %1490 = vmatprep.subr.mxu0 0.0
        %1491 = vmatpush2.msra.mxu0 0.0
        %1492 = vmatprep.subr.mxu0 0.0
        %1493 = vmatpush2.msra.mxu0 0.0
        %1494 = vmatprep.subr.mxu0 0.0
        %1495 = vmatpush2.msra.mxu0 0.0
        %1496 = vmatprep.subr.mxu0 0.0
        %1497 = vmatpush2.msra.mxu0 0.0
        %1498 = vmatprep.mubr.f32.mxu0 0.0
        %v1499 = vand.u32 %v1118, 4294901760
        %v1500 = vsub.f32 %v1118, %v1499
        %v1501 = vand.u32 %v1500, 4294901760
        %1502 = vmatmul.mubr.f32.gmra.mxu0 %v1501
        %v1503 = vpop.f32.mrf.mxu0
        %v1504 = vadd.f32 %v1408, %v1503
        %v1505 = vpop.f32.mrf.mxu0
        %1506 = vmatprep.mubr.f32.mxu0 0.0
        %v1507 = vand.u32 %v1121, 4294901760
        %v1508 = vsub.f32 %v1121, %v1507
        %v1509 = vand.u32 %v1508, 4294901760
        %1510 = vmatmul.mubr.f32.gmra.mxu0 %v1509
        %v1511 = vpop.f32.mrf.mxu0
        %v1512 = vadd.f32 %v1415, %v1511
        %v1513 = vpop.f32.mrf.mxu0
        %1514 = vmatprep.mubr.f32.mxu0 0.0
        %v1515 = vand.u32 %v1124, 4294901760
        %v1516 = vsub.f32 %v1124, %v1515
        %v1517 = vand.u32 %v1516, 4294901760
        %1518 = vmatmul.mubr.f32.gmra.mxu0 %v1517
        %v1519 = vpop.f32.mrf.mxu0
        %v1520 = vadd.f32 %v1422, %v1519
        %v1521 = vpop.f32.mrf.mxu0
        %1522 = vmatprep.mubr.f32.mxu0 0.0
        %v1523 = vand.u32 %v1127, 4294901760
        %v1524 = vsub.f32 %v1127, %v1523
        %v1525 = vand.u32 %v1524, 4294901760
        %1526 = vmatmul.mubr.f32.gmra.mxu0 %v1525
        %v1527 = vpop.f32.mrf.mxu0
        %v1528 = vadd.f32 %v1429, %v1527
        %v1529 = vpop.f32.mrf.mxu0
        %1530 = vdwg.mxu0
        %1531 = vmatprep.subr.mxu0 0.0
        %1532 = vmatpush1.msra.mxu0 0.0
        %1533 = vmatprep.subr.mxu0 0.0
        %1534 = vmatpush1.msra.mxu0 0.0
        %1535 = vmatprep.subr.mxu0 0.0
        %1536 = vmatpush1.msra.mxu0 0.0
        %1537 = vmatprep.subr.mxu0 0.0
        %1538 = vmatpush1.msra.mxu0 0.0
        %1539 = vmatprep.subr.mxu0 0.0
        %1540 = vmatpush1.msra.mxu0 0.0
        %1541 = vmatprep.subr.mxu0 0.0
        %1542 = vmatpush1.msra.mxu0 0.0
        %1543 = vmatprep.subr.mxu0 0.0
        %1544 = vmatpush1.msra.mxu0 0.0
        %1545 = vmatprep.subr.mxu0 0.0
        %1546 = vmatpush1.msra.mxu0 0.0
        %1547 = vmatprep.subr.mxu0 0.0
        %1548 = vmatpush1.msra.mxu0 0.0
        %1549 = vmatprep.subr.mxu0 0.0
        %1550 = vmatpush1.msra.mxu0 0.0
        %1551 = vmatprep.subr.mxu0 0.0
        %1552 = vmatpush1.msra.mxu0 0.0
        %1553 = vmatprep.subr.mxu0 0.0
        %1554 = vmatpush1.msra.mxu0 0.0
        %1555 = vmatprep.subr.mxu0 0.0
        %1556 = vmatpush1.msra.mxu0 0.0
        %1557 = vmatprep.subr.mxu0 0.0
        %1558 = vmatpush1.msra.mxu0 0.0
        %1559 = vmatprep.subr.mxu0 0.0
        %v1560 = vand.u32 %v195, 4294901760
        %v1561 = vsub.f32 %v195, %v1560
        %v1562 = vand.u32 %v1561, 4294901760
        %1563 = vmatpush1.msra.mxu0 %v1562
        %1564 = vmatprep.subr.mxu0 0.0
        %v1565 = vand.u32 %v194, 4294901760
        %v1566 = vsub.f32 %v194, %v1565
        %v1567 = vand.u32 %v1566, 4294901760
        %1568 = vmatpush1.msra.mxu0 %v1567
        %1569 = vmatprep.subr.mxu0 0.0
        %1570 = vmatpush2.msra.mxu0 0.0
        %1571 = vmatprep.subr.mxu0 0.0
        %1572 = vmatpush2.msra.mxu0 0.0
        %1573 = vmatprep.subr.mxu0 0.0
        %1574 = vmatpush2.msra.mxu0 0.0
        %1575 = vmatprep.subr.mxu0 0.0
        %1576 = vmatpush2.msra.mxu0 0.0
        %1577 = vmatprep.subr.mxu0 0.0
        %1578 = vmatpush2.msra.mxu0 0.0
        %1579 = vmatprep.subr.mxu0 0.0
        %1580 = vmatpush2.msra.mxu0 0.0
        %1581 = vmatprep.subr.mxu0 0.0
        %1582 = vmatpush2.msra.mxu0 0.0
        %1583 = vmatprep.subr.mxu0 0.0
        %1584 = vmatpush2.msra.mxu0 0.0
        %1585 = vmatprep.subr.mxu0 0.0
        %1586 = vmatpush2.msra.mxu0 0.0
        %1587 = vmatprep.subr.mxu0 0.0
        %1588 = vmatpush2.msra.mxu0 0.0
        %1589 = vmatprep.subr.mxu0 0.0
        %1590 = vmatpush2.msra.mxu0 0.0
        %1591 = vmatprep.subr.mxu0 0.0
        %1592 = vmatpush2.msra.mxu0 0.0
        %1593 = vmatprep.subr.mxu0 0.0
        %1594 = vmatpush2.msra.mxu0 0.0
        %1595 = vmatprep.subr.mxu0 0.0
        %1596 = vmatpush2.msra.mxu0 0.0
        %1597 = vmatprep.subr.mxu0 0.0
        %1598 = vmatpush2.msra.mxu0 0.0
        %1599 = vmatprep.subr.mxu0 0.0
        %1600 = vmatpush2.msra.mxu0 0.0
        %1601 = vmatprep.mubr.f32.mxu0 0.0
        %v1602 = vand.u32 %v1118, 4294901760
        %1603 = vmatmul.mubr.f32.gmra.mxu0 %v1602
        %v1604 = vpop.f32.mrf.mxu0
        %v1605 = vadd.f32 %v1504, %v1604
        %v1606 = vpop.f32.mrf.mxu0
        %1607 = vmatprep.mubr.f32.mxu0 0.0
        %v1608 = vand.u32 %v1121, 4294901760
        %1609 = vmatmul.mubr.f32.gmra.mxu0 %v1608
        %v1610 = vpop.f32.mrf.mxu0
        %v1611 = vadd.f32 %v1512, %v1610
        %v1612 = vpop.f32.mrf.mxu0
        %1613 = vmatprep.mubr.f32.mxu0 0.0
        %v1614 = vand.u32 %v1124, 4294901760
        %1615 = vmatmul.mubr.f32.gmra.mxu0 %v1614
        %v1616 = vpop.f32.mrf.mxu0
        %v1617 = vadd.f32 %v1520, %v1616
        %v1618 = vpop.f32.mrf.mxu0
        %1619 = vmatprep.mubr.f32.mxu0 0.0
        %v1620 = vand.u32 %v1127, 4294901760
        %1621 = vmatmul.mubr.f32.gmra.mxu0 %v1620
        %v1622 = vpop.f32.mrf.mxu0
        %v1623 = vadd.f32 %v1528, %v1622
        %v1624 = vpop.f32.mrf.mxu0
        %1625 = vdwg.mxu0
        %1626 = vmatprep.subr.mxu0 0.0
        %1627 = vmatpush1.msra.mxu0 0.0
        %1628 = vmatprep.subr.mxu0 0.0
        %1629 = vmatpush1.msra.mxu0 0.0
        %1630 = vmatprep.subr.mxu0 0.0
        %1631 = vmatpush1.msra.mxu0 0.0
        %1632 = vmatprep.subr.mxu0 0.0
        %1633 = vmatpush1.msra.mxu0 0.0
        %1634 = vmatprep.subr.mxu0 0.0
        %1635 = vmatpush1.msra.mxu0 0.0
        %1636 = vmatprep.subr.mxu0 0.0
        %1637 = vmatpush1.msra.mxu0 0.0
        %1638 = vmatprep.subr.mxu0 0.0
        %1639 = vmatpush1.msra.mxu0 0.0
        %1640 = vmatprep.subr.mxu0 0.0
        %1641 = vmatpush1.msra.mxu0 0.0
        %1642 = vmatprep.subr.mxu0 0.0
        %1643 = vmatpush1.msra.mxu0 0.0
        %1644 = vmatprep.subr.mxu0 0.0
        %1645 = vmatpush1.msra.mxu0 0.0
        %1646 = vmatprep.subr.mxu0 0.0
        %1647 = vmatpush1.msra.mxu0 0.0
        %1648 = vmatprep.subr.mxu0 0.0
        %1649 = vmatpush1.msra.mxu0 0.0
        %1650 = vmatprep.subr.mxu0 0.0
        %1651 = vmatpush1.msra.mxu0 0.0
        %1652 = vmatprep.subr.mxu0 0.0
        %1653 = vmatpush1.msra.mxu0 0.0
        %1654 = vmatprep.subr.mxu0 0.0
        %v1655 = vand.u32 %v195, 4294901760
        %1656 = vmatpush1.msra.mxu0 %v1655
        %1657 = vmatprep.subr.mxu0 0.0
        %v1658 = vand.u32 %v194, 4294901760
        %1659 = vmatpush1.msra.mxu0 %v1658
        %1660 = vmatprep.subr.mxu0 0.0
        %1661 = vmatpush2.msra.mxu0 0.0
        %1662 = vmatprep.subr.mxu0 0.0
        %1663 = vmatpush2.msra.mxu0 0.0
        %1664 = vmatprep.subr.mxu0 0.0
        %1665 = vmatpush2.msra.mxu0 0.0
        %1666 = vmatprep.subr.mxu0 0.0
        %1667 = vmatpush2.msra.mxu0 0.0
        %1668 = vmatprep.subr.mxu0 0.0
        %1669 = vmatpush2.msra.mxu0 0.0
        %1670 = vmatprep.subr.mxu0 0.0
        %1671 = vmatpush2.msra.mxu0 0.0
        %1672 = vmatprep.subr.mxu0 0.0
        %1673 = vmatpush2.msra.mxu0 0.0
        %1674 = vmatprep.subr.mxu0 0.0
        %1675 = vmatpush2.msra.mxu0 0.0
        %1676 = vmatprep.subr.mxu0 0.0
        %1677 = vmatpush2.msra.mxu0 0.0
        %1678 = vmatprep.subr.mxu0 0.0
        %1679 = vmatpush2.msra.mxu0 0.0
        %1680 = vmatprep.subr.mxu0 0.0
        %1681 = vmatpush2.msra.mxu0 0.0
        %1682 = vmatprep.subr.mxu0 0.0
        %1683 = vmatpush2.msra.mxu0 0.0
        %1684 = vmatprep.subr.mxu0 0.0
        %1685 = vmatpush2.msra.mxu0 0.0
        %1686 = vmatprep.subr.mxu0 0.0
        %1687 = vmatpush2.msra.mxu0 0.0
        %1688 = vmatprep.subr.mxu0 0.0
        %1689 = vmatpush2.msra.mxu0 0.0
        %1690 = vmatprep.subr.mxu0 0.0
        %1691 = vmatpush2.msra.mxu0 0.0
        %1692 = vmatprep.mubr.f32.mxu0 0.0
        %v1693 = vand.u32 %v1118, 4294901760
        %1694 = vmatmul.mubr.f32.gmra.mxu0 %v1693
        %v1695 = vpop.f32.mrf.mxu0
        %v1696 = vadd.f32 %v1605, %v1695
        %v1697 = vpop.f32.mrf.mxu0
        %1698 = vmatprep.mubr.f32.mxu0 0.0
        %v1699 = vand.u32 %v1121, 4294901760
        %1700 = vmatmul.mubr.f32.gmra.mxu0 %v1699
        %v1701 = vpop.f32.mrf.mxu0
        %v1702 = vadd.f32 %v1611, %v1701
        %v1703 = vpop.f32.mrf.mxu0
        %1704 = vmatprep.mubr.f32.mxu0 0.0
        %v1705 = vand.u32 %v1124, 4294901760
        %1706 = vmatmul.mubr.f32.gmra.mxu0 %v1705
        %v1707 = vpop.f32.mrf.mxu0
        %v1708 = vadd.f32 %v1617, %v1707
        %v1709 = vpop.f32.mrf.mxu0
        %1710 = vmatprep.mubr.f32.mxu0 0.0
        %v1711 = vand.u32 %v1127, 4294901760
        %1712 = vmatmul.mubr.f32.gmra.mxu0 %v1711
        %v1713 = vpop.f32.mrf.mxu0
        %v1714 = vadd.f32 %v1623, %v1713
        %v1715 = vpop.f32.mrf.mxu0
        %1716 = vdwg.mxu0
        %1717 = vxpose.xlu0.b32.start [1/16] %v1696, 128
        %1718 = vxpose.xlu0.b32.cont [2/16] 0.0, 128
        %1719 = vxpose.xlu0.b32.cont [3/16] 0.0, 128
        %1720 = vxpose.xlu0.b32.cont [4/16] 0.0, 128
        %1721 = vxpose.xlu0.b32.cont [5/16] 0.0, 128
        %1722 = vxpose.xlu0.b32.cont [6/16] 0.0, 128
        %1723 = vxpose.xlu0.b32.cont [7/16] 0.0, 128
        %1724 = vxpose.xlu0.b32.cont [8/16] 0.0, 128
        %1725 = vxpose.xlu0.b32.cont [9/16] 0.0, 128
        %1726 = vxpose.xlu0.b32.cont [10/16] 0.0, 128
        %1727 = vxpose.xlu0.b32.cont [11/16] 0.0, 128
        %1728 = vxpose.xlu0.b32.cont [12/16] 0.0, 128
        %1729 = vxpose.xlu0.b32.cont [13/16] 0.0, 128
        %1730 = vxpose.xlu0.b32.cont [14/16] 0.0, 128
        %1731 = vxpose.xlu0.b32.cont [15/16] 0.0, 128
        %1732 = vxpose.xlu0.b32.end [16/16] 0.0, 128
        %v1733 = vpop.trf.xlu0
        %v1734 = vpop.trf.xlu0
        %v1735 = vpop.trf.xlu0
        %v1736 = vpop.trf.xlu0
        %v1737 = vpop.trf.xlu0
        %v1738 = vpop.trf.xlu0
        %v1739 = vpop.trf.xlu0
        %v1740 = vpop.trf.xlu0
        %v1741 = vpop.trf.xlu0
        %v1742 = vpop.trf.xlu0
        %v1743 = vpop.trf.xlu0
        %v1744 = vpop.trf.xlu0
        %v1745 = vpop.trf.xlu0
        %v1746 = vpop.trf.xlu0
        %v1747 = vpop.trf.xlu0
        %v1748 = vpop.trf.xlu0
        %1749 = vxpose.xlu0.b32.start [1/16] %v1702, 128
        %1750 = vxpose.xlu0.b32.cont [2/16] 0.0, 128
        %1751 = vxpose.xlu0.b32.cont [3/16] 0.0, 128
        %1752 = vxpose.xlu0.b32.cont [4/16] 0.0, 128
        %1753 = vxpose.xlu0.b32.cont [5/16] 0.0, 128
        %1754 = vxpose.xlu0.b32.cont [6/16] 0.0, 128
        %1755 = vxpose.xlu0.b32.cont [7/16] 0.0, 128
        %1756 = vxpose.xlu0.b32.cont [8/16] 0.0, 128
        %1757 = vxpose.xlu0.b32.cont [9/16] 0.0, 128
        %1758 = vxpose.xlu0.b32.cont [10/16] 0.0, 128
        %1759 = vxpose.xlu0.b32.cont [11/16] 0.0, 128
        %1760 = vxpose.xlu0.b32.cont [12/16] 0.0, 128
        %1761 = vxpose.xlu0.b32.cont [13/16] 0.0, 128
        %1762 = vxpose.xlu0.b32.cont [14/16] 0.0, 128
        %1763 = vxpose.xlu0.b32.cont [15/16] 0.0, 128
        %1764 = vxpose.xlu0.b32.end [16/16] 0.0, 128
        %v1765 = vpop.trf.xlu0
        %v1766 = vpop.trf.xlu0
        %v1767 = vpop.trf.xlu0
        %v1768 = vpop.trf.xlu0
        %v1769 = vpop.trf.xlu0
        %v1770 = vpop.trf.xlu0
        %v1771 = vpop.trf.xlu0
        %v1772 = vpop.trf.xlu0
        %v1773 = vpop.trf.xlu0
        %v1774 = vpop.trf.xlu0
        %v1775 = vpop.trf.xlu0
        %v1776 = vpop.trf.xlu0
        %v1777 = vpop.trf.xlu0
        %v1778 = vpop.trf.xlu0
        %v1779 = vpop.trf.xlu0
        %v1780 = vpop.trf.xlu0
        %1781 = vxpose.xlu0.b32.start [1/16] %v1708, 128
        %1782 = vxpose.xlu0.b32.cont [2/16] 0.0, 128
        %1783 = vxpose.xlu0.b32.cont [3/16] 0.0, 128
        %1784 = vxpose.xlu0.b32.cont [4/16] 0.0, 128
        %1785 = vxpose.xlu0.b32.cont [5/16] 0.0, 128
        %1786 = vxpose.xlu0.b32.cont [6/16] 0.0, 128
        %1787 = vxpose.xlu0.b32.cont [7/16] 0.0, 128
        %1788 = vxpose.xlu0.b32.cont [8/16] 0.0, 128
        %1789 = vxpose.xlu0.b32.cont [9/16] 0.0, 128
        %1790 = vxpose.xlu0.b32.cont [10/16] 0.0, 128
        %1791 = vxpose.xlu0.b32.cont [11/16] 0.0, 128
        %1792 = vxpose.xlu0.b32.cont [12/16] 0.0, 128
        %1793 = vxpose.xlu0.b32.cont [13/16] 0.0, 128
        %1794 = vxpose.xlu0.b32.cont [14/16] 0.0, 128
        %1795 = vxpose.xlu0.b32.cont [15/16] 0.0, 128
        %1796 = vxpose.xlu0.b32.end [16/16] 0.0, 128
        %v1797 = vpop.trf.xlu0
        %v1798 = vpop.trf.xlu0
        %v1799 = vpop.trf.xlu0
        %v1800 = vpop.trf.xlu0
        %v1801 = vpop.trf.xlu0
        %v1802 = vpop.trf.xlu0
        %v1803 = vpop.trf.xlu0
        %v1804 = vpop.trf.xlu0
        %v1805 = vpop.trf.xlu0
        %v1806 = vpop.trf.xlu0
        %v1807 = vpop.trf.xlu0
        %v1808 = vpop.trf.xlu0
        %v1809 = vpop.trf.xlu0
        %v1810 = vpop.trf.xlu0
        %v1811 = vpop.trf.xlu0
        %v1812 = vpop.trf.xlu0
        %1813 = vxpose.xlu0.b32.start [1/16] %v1714, 128
        %1814 = vxpose.xlu0.b32.cont [2/16] 0.0, 128
        %1815 = vxpose.xlu0.b32.cont [3/16] 0.0, 128
        %1816 = vxpose.xlu0.b32.cont [4/16] 0.0, 128
        %1817 = vxpose.xlu0.b32.cont [5/16] 0.0, 128
        %1818 = vxpose.xlu0.b32.cont [6/16] 0.0, 128
        %1819 = vxpose.xlu0.b32.cont [7/16] 0.0, 128
        %1820 = vxpose.xlu0.b32.cont [8/16] 0.0, 128
        %1821 = vxpose.xlu0.b32.cont [9/16] 0.0, 128
        %1822 = vxpose.xlu0.b32.cont [10/16] 0.0, 128
        %1823 = vxpose.xlu0.b32.cont [11/16] 0.0, 128
        %1824 = vxpose.xlu0.b32.cont [12/16] 0.0, 128
        %1825 = vxpose.xlu0.b32.cont [13/16] 0.0, 128
        %1826 = vxpose.xlu0.b32.cont [14/16] 0.0, 128
        %1827 = vxpose.xlu0.b32.cont [15/16] 0.0, 128
        %1828 = vxpose.xlu0.b32.end [16/16] 0.0, 128
        %v1829 = vpop.trf.xlu0
        %v1830 = vpop.trf.xlu0
        %v1831 = vpop.trf.xlu0
        %v1832 = vpop.trf.xlu0
        %v1833 = vpop.trf.xlu0
        %v1834 = vpop.trf.xlu0
        %v1835 = vpop.trf.xlu0
        %v1836 = vpop.trf.xlu0
        %v1837 = vpop.trf.xlu0
        %v1838 = vpop.trf.xlu0
        %v1839 = vpop.trf.xlu0
        %v1840 = vpop.trf.xlu0
        %v1841 = vpop.trf.xlu0
        %v1842 = vpop.trf.xlu0
        %v1843 = vpop.trf.xlu0
        %v1844 = vpop.trf.xlu0
        %vm1845 = vcmask 64512
        %1846 = vst.msk [vmem:[%s189] sm:$0xff] %vm1845, %v1733
        %1847 = vst.msk [vmem:[%s189 + $0x8] sm:$0xff] %vm1845, %v1765
        %1848 = vst.msk [vmem:[%s189 + $0x10] sm:$0xff] %vm1845, %v1797
        %1849 = vst.msk [vmem:[%s189 + $0x18] sm:$0xff] %vm1845, %v1829
        %s1850 = sand.u32 %s96, 1
        %s1851 = scalar_lea.sflag [#allocation4], %s1850
        %s1852 = sand.u32 %s96, 1
        %s1853 = smul.addr %s1852, 32
        %s1854 = scalar_lea.vmem [#allocation5], %s1853
        // Predicated region
        $region37: #{tpu_custom_call.1} parent=31 // pred_check
          %p1855 = pneg %p106
        $region38: #{tpu_custom_call.1} parent=31 // pred_check_branch
          %1857 = sbr.rel (%p1855) target = $region40
        $region39: #{tpu_custom_call.1} parent=31 // pred_region
          %s1858 = smul.u32 4, %s20
          %s1860 = ssub.s32 512, 512
          %1861 = vsyncadd %s1851, %s1860
          %s1862 = smul.addr %s1858, 128
          %s1863 = scalar_lea.hbm %s3, %s1862
          %s1864 = sshll.u32 %s1854, 4
          %s1865 = int_to_ptr.vmem [resolvable:$true] %s1864
          %1870 = dma.vmem_to_hbm [thread:$0]  %s1865, 512, %s1863, %s1851, 128, 128, 8
        $region40: #{tpu_custom_call.1} parent=31 // pred_fallthru
          _
      $region32: #{tpu_custom_call.1} parent=5 // pred_fallthru
        _
      %p1871 = scmp.le.s32.totalorder 2, %s15
      // Predicated region
      $region41: #{tpu_custom_call.1} parent=5 // pred_check
        %p1872 = pneg %p1871
      $region42: #{tpu_custom_call.1} parent=5 // pred_check_branch
        %1874 = sbr.rel (%p1872) target = $region44
      $region43: #{tpu_custom_call.1} parent=5 // pred_region
        %s1875 = ssub.s32 %s15, 2
        // Predicated region
        $region45: #{tpu_custom_call.1} parent=43 // pred_check
          %p1876 = pneg %p112
        $region46: #{tpu_custom_call.1} parent=43 // pred_check_branch
          %1878 = sbr.rel (%p1876) target = $region48
        $region47: #{tpu_custom_call.1} parent=43 // pred_region
          %s1879 = sand.u32 %s97, 1
          %s1880 = scalar_lea.sflag [#allocation4], %s1879
          %s1881 = sand.u32 %s97, 1
          %s1882 = smul.addr %s1881, 32
          %s1883 = scalar_lea.vmem [#allocation5], %s1882
          %1884 = dma.done %s1880, 512
        $region48: #{tpu_custom_call.1} parent=43 // pred_fallthru
          _
      $region44: #{tpu_custom_call.1} parent=5 // pred_fallthru
        _
    $region6: #{tpu_custom_call.1} parent=1 // loop_footer
      %s19 = sadd.s32 1, %s15
    $region7: #{tpu_custom_call.1} parent=1 // loop_footer_branch
      %14 = sbr.rel target = $region3
    $region8: #{tpu_custom_call.1} parent=1 // loop_exit
      _
    %1885 = vsyncpa [#allocation3], 1
    %s1886 = scalar_lea.sflag [#allocation3], 1
    %1887 = vsyncpa %s1886, 1
    %1888 = vsyncpa [#allocation4], 1
    %s1889 = scalar_lea.sflag [#allocation4], 1
    %1890 = vsyncpa %s1889, 1

</llo_original>
